<compile_context>
chip_gen: v7x
topology: tpu7x:2x2x1
jax: 0.10.0
libtpu: 0.0.40
codegen_flags: <defaults>
</compile_context>

<pallas_src>
import functools

import jax
import jax.numpy as jnp
from jax.experimental import pallas as pl
from jax.experimental.pallas import tpu as pltpu

EPS_IN = 1e-5    # nn.InstanceNorm2d default eps
EPS_SN = 1e-12   # spectral_norm normalize eps


def _vmem_limit_bytes():
    """Per-generation VMEM ceiling with double-buffer / internal-scratch headroom."""
    try:
        cap = int(pltpu.get_tpu_info().vmem_capacity_bytes)
        # 128 MiB parts (v5e/v6e) -> 96 MiB; 64 MiB parts (v7x) -> 48 MiB.
        return int(min(100 * 1024 * 1024, max(32 * 1024 * 1024, cap * 3 // 4)))
    except Exception:
        return 64 * 1024 * 1024


# ------------------------------- Pallas kernel ------------------------------

def _conv_in_relu(h_bf16, w_ref, ho, wo):
    """pano pad -> 3x3 conv (9 bf16 matmuls, f32 acc) -> InstanceNorm -> ReLU.

    h_bf16: (Ho, Wo, Cin) bf16 activation (VMEM / vreg resident, true channels)
    w_ref : (9, Cin, Cout) bf16 weights, tap-major (t = kh*3 + kw)
    returns (Ho*Wo, Cout) f32
    """
    hw = ho * wo
    cin = h_bf16.shape[-1]

    # pano pad ONCE, already in bf16 (no per-tap casts): circular W then
    # replicate H — same order as F.pad(...,'circular'); F.pad(...,'replicate').
    hp = jnp.concatenate([h_bf16[:, -1:, :], h_bf16, h_bf16[:, :1, :]], axis=1)
    hp = jnp.concatenate([hp[:1], hp, hp[-1:]], axis=0)          # (Ho+2, Wo+2, C)

    # Hoist the 3 W-shifted slabs (one strided copy each) and flatten rows, so
    # every tap below is a contiguous leading-dim slice — 3 copies per conv
    # instead of 9 strided (Ho,Wo) windows + 9 full-size casts.
    cols = [hp[:, kw:kw + wo, :].reshape((ho + 2) * wo, cin) for kw in range(3)]

    acc = None
    for kh in range(3):
        for kw in range(3):
            patch = cols[kw][kh * wo:kh * wo + hw]               # (HW, Cin) bf16
            d = jnp.dot(patch, w_ref[kh * 3 + kw],
                        preferred_element_type=jnp.float32)
            acc = d if acc is None else acc + d
    # TODO(synk): v6e/v7x — pack tap pairs to a deeper K contraction and use MRB
    # in-place accumulation (matmul_push_rhs/acc_lhs/pop) to cut vmatmul count.

    # InstanceNorm2d (affine=False, biased variance), TWO-pass f32 stats
    # (avoids the E[x^2]-mean^2 cancellation flagged in review), then ReLU.
    inv_hw = 1.0 / hw
    mean = jnp.sum(acc, axis=0, keepdims=True) * inv_hw
    cen = acc - mean
    var = jnp.sum(cen * cen, axis=0, keepdims=True) * inv_hw
    y = cen * jax.lax.rsqrt(var + EPS_IN)
    return jnp.maximum(y, 0.0)                                   # ReLU


def _down_kernel(x_ref, w1_ref, w2_ref, o_ref, *, ho, wo, c_in):
    # x_ref : (1, Ho, 2, Wo, 2*Cin) bf16  (2x2 pool-window offsets on '2'/'2*Cin')
    # w*_ref: (9, Cin, Cmid) / (9, Cmid, Cout) bf16 (resident across batch grid)
    # o_ref : (1, Ho*Wo, Cout) bf16       (true channels, no lane padding)
    xv = x_ref[0]                                      # (Ho, 2, Wo, 2*Cin) bf16
    # fused 2x2 max-pool in bf16 (commutes with the bf16 rounding of the input)
    top = jnp.maximum(xv[:, 0, :, :c_in], xv[:, 0, :, c_in:])
    bot = jnp.maximum(xv[:, 1, :, :c_in], xv[:, 1, :, c_in:])
    h = jnp.maximum(top, bot)                          # (Ho, Wo, Cin) bf16

    h = _conv_in_relu(h, w1_ref, ho, wo)               # (Ho*Wo, Cmid) f32
    h = h.reshape(ho, wo, h.shape[-1]).astype(jnp.bfloat16)   # ONE cast per conv
    h = _conv_in_relu(h, w2_ref, ho, wo)               # (Ho*Wo, Cout) f32
    o_ref[0] = h.astype(o_ref.dtype)                   # bf16 store (half the HBM write)


# ----------------------------- wrappers (JAX glue) ---------------------------

def spectral_normalize(w_oihw, u):
    """SNConv2d weight normalization: one power iteration with the stored u."""
    cout = w_oihw.shape[0]
    mat = w_oihw.reshape(cout, -1)                     # (Cout, Cin*9)
    v = mat.T @ u
    v = v / (jnp.linalg.norm(v) + EPS_SN)
    u_new = mat @ v
    u_new = u_new / (jnp.linalg.norm(u_new) + EPS_SN)
    sigma = u_new @ (mat @ v)
    # TODO(synk): return u_new to persist the power-iteration buffer like
    # PyTorch's training-mode spectral_norm (single eval-style forward here).
    return w_oihw / sigma


def _prep_weight(w_oihw, u):
    """SN-normalize, reorder to tap-major (9, Cin, Cout), cast to bf16 (MXU)."""
    cout, cin = w_oihw.shape[0], w_oihw.shape[1]
    w_sn = spectral_normalize(w_oihw, u)                      # (Cout, Cin, 3, 3)
    w9 = jnp.transpose(w_sn, (2, 3, 1, 0)).reshape(9, cin, cout)
    return w9.astype(jnp.bfloat16)


def down_forward(x_nchw, params):
    """down(in_ch, out_ch, conv='conv2', norm='in', act='relu', pad='pano')."""
    (w1, u1), (w2, u2) = params
    n, c_in, h, w = x_nchw.shape
    c_mid, c_out = w1.shape[0], w2.shape[0]
    ho, wo = h // 2, w // 2                       # MaxPool2d(2) floor semantics

    # NCHW -> NHWC, crop odd spatial dims, cast to bf16 (halves the x HBM read),
    # then a free contiguous reshape exposing the 2x2 pool windows.  Channels
    # stay at their TRUE width (no 128-lane zero-pad in HBM).
    x = jnp.transpose(x_nchw[:, :, :2 * ho, :2 * wo], (0, 2, 3, 1))
    x = x.astype(jnp.bfloat16).reshape(n, ho, 2, wo, 2 * c_in)

    w1p = _prep_weight(w1, u1)                    # (9, Cin,  Cmid) bf16
    w2p = _prep_weight(w2, u2)                    # (9, Cmid, Cout) bf16

    kernel = functools.partial(_down_kernel, ho=ho, wo=wo, c_in=c_in)
    y = pl.pallas_call(
        kernel,
        out_shape=jax.ShapeDtypeStruct((n, ho * wo, c_out), jnp.bfloat16),
        grid_spec=pltpu.PrefetchScalarGridSpec(
            num_scalar_prefetch=0,
            grid=(n,),
            in_specs=[
                pl.BlockSpec((1, ho, 2, wo, 2 * c_in),
                             lambda i: (i, 0, 0, 0, 0)),
                # TODO(synk): pipeline_mode=pl.Buffered(1) on the (constant)
                # weight specs once C >= 256 to halve their VMEM residency.
                pl.BlockSpec((9, c_in, c_mid), lambda i: (0, 0, 0)),
                pl.BlockSpec((9, c_mid, c_out), lambda i: (0, 0, 0)),
            ],
            out_specs=pl.BlockSpec((1, ho * wo, c_out), lambda i: (i, 0, 0)),
        ),
        compiler_params=pltpu.CompilerParams(
            dimension_semantics=("parallel",),     # batch across TCs on v7x
            vmem_limit_bytes=_vmem_limit_bytes(),  # per-generation ceiling
        ),
    )(x, w1p, w2p)
    # TODO(synk): for large images on v7x (64 MiB VMEM), add a spatial-tile grid
    # axis with two-phase InstanceNorm stats (pl.when init/finalize + scratch
    # accumulators), and/or split conv2's Cout across a second "parallel" axis
    # when N < number of TensorCores.

    y = y.reshape(n, ho, wo, c_out)                # no lane padding to strip
    return jnp.transpose(y, (0, 3, 1, 2)).astype(jnp.float32)   # NHWC -> NCHW


def init_down_params(key, in_ch, out_ch):
    k1, k2, k3, k4 = jax.random.split(key, 4)
    w1 = 0.1 * jax.random.normal(k1, (out_ch, in_ch, 3, 3), jnp.float32)
    u1 = jax.random.normal(k2, (out_ch,), jnp.float32)
    u1 = u1 / (jnp.linalg.norm(u1) + EPS_SN)
    w2 = 0.1 * jax.random.normal(k3, (out_ch, out_ch, 3, 3), jnp.float32)
    u2 = jax.random.normal(k4, (out_ch,), jnp.float32)
    u2 = u2 / (jnp.linalg.norm(u2) + EPS_SN)
    return ((w1, u1), (w2, u2))


# --------------------------- pure-JAX reference ------------------------------

def _reference_down(x_nchw, params):
    (w1, u1), (w2, u2) = params
    n, c, h, w = x_nchw.shape
    x = x_nchw[:, :, :2 * (h // 2), :2 * (w // 2)]
    x = jnp.max(x.reshape(n, c, h // 2, 2, w // 2, 2), axis=(3, 5))   # MaxPool2d(2)
    for (wt, u) in ((w1, u1), (w2, u2)):
        w_sn = spectral_normalize(wt, u)
        xp = jnp.concatenate([x[..., -1:], x, x[..., :1]], axis=-1)        # circular W
        xp = jnp.concatenate([xp[:, :, :1], xp, xp[:, :, -1:]], axis=2)    # replicate H
        y = jax.lax.conv_general_dilated(
            xp, w_sn, (1, 1), 'VALID',
            dimension_numbers=('NCHW', 'OIHW', 'NCHW'))
        mean = jnp.mean(y, axis=(2, 3), keepdims=True)
        var = jnp.mean((y - mean) ** 2, axis=(2, 3), keepdims=True)
        x = jnp.maximum((y - mean) * jax.lax.rsqrt(var + EPS_IN), 0.0)
    return x


if __name__ == "__main__":
    key = jax.random.PRNGKey(0)
    kx, kp = jax.random.split(key)

    N, in_ch, out_ch, HW = 2, 4, 8, 16
    x = jax.random.normal(kx, (N, in_ch, HW, HW), jnp.float32)   # NCHW
    params = init_down_params(kp, in_ch, out_ch)

    y = jax.jit(down_forward)(x, params)
    y = jax.block_until_ready(y)

    assert y.shape == (N, out_ch, HW // 2, HW // 2), y.shape
    assert bool(jnp.all(jnp.isfinite(y)))
    assert bool(jnp.all(y >= 0.0))  # ReLU output

    y_ref = _reference_down(x, params)
    err = float(jnp.max(jnp.abs(y - y_ref)))
    assert err < 0.1, f"max abs err vs reference: {err}"  # bf16 matmul/IO tolerance
    print("KERNEL_OK")
</pallas_src>

<mosaic_0001>
module attributes {stable_mosaic.version = 11 : i64} {
  func.func @_down_kernel(%arg0: i32, %arg1: memref<1x8x2x8x8xbf16, #tpu.memory_space<vmem>>, %arg2: memref<9x4x8xbf16, #tpu.memory_space<vmem>>, %arg3: memref<9x8x8xbf16, #tpu.memory_space<vmem>>, %arg4: memref<1x64x8xbf16, #tpu.memory_space<vmem>>) attributes {dimension_semantics = [#tpu.dimension_semantics<parallel>], iteration_bounds = array<i64: 2>, scalar_prefetch = 0 : i64, scratch_operands = 0 : i64, tpu.core_type = #tpu.core_type<tc>, window_params = [{transform_indices = @transform_0, window_bounds = array<i64: 1, 8, 2, 8, 8>}, {pipeline_mode = #tpu.pipeline_mode<synchronous>, transform_indices = @transform_1, window_bounds = array<i64: 9, 4, 8>}, {pipeline_mode = #tpu.pipeline_mode<synchronous>, transform_indices = @transform_2, window_bounds = array<i64: 9, 8, 8>}, {transform_indices = @transform_3, window_bounds = array<i64: 1, 64, 8>}]} {
    %c0 = arith.constant 0 : index
    %c0_0 = arith.constant 0 : index
    %c0_1 = arith.constant 0 : index
    %c0_2 = arith.constant 0 : index
    %c0_3 = arith.constant 0 : index
    %0 = vector.load %arg1[%c0, %c0_0, %c0_1, %c0_2, %c0_3] : memref<1x8x2x8x8xbf16, #tpu.memory_space<vmem>>, vector<1x8x2x8x8xbf16>
    %1 = vector.shape_cast %0 : vector<1x8x2x8x8xbf16> to vector<8x2x8x8xbf16>
    %2 = vector.extract_strided_slice %1 {offsets = [0, 0, 0, 0], sizes = [8, 1, 8, 4], strides = [1, 1, 1, 1]} : vector<8x2x8x8xbf16> to vector<8x1x8x4xbf16>
    %3 = vector.shape_cast %2 : vector<8x1x8x4xbf16> to vector<8x8x4xbf16>
    %4 = vector.extract_strided_slice %1 {offsets = [0, 0, 0, 4], sizes = [8, 1, 8, 4], strides = [1, 1, 1, 1]} : vector<8x2x8x8xbf16> to vector<8x1x8x4xbf16>
    %5 = vector.shape_cast %4 : vector<8x1x8x4xbf16> to vector<8x8x4xbf16>
    %6 = arith.maximumf %3, %5 : vector<8x8x4xbf16>
    %7 = vector.extract_strided_slice %1 {offsets = [0, 1, 0, 0], sizes = [8, 1, 8, 4], strides = [1, 1, 1, 1]} : vector<8x2x8x8xbf16> to vector<8x1x8x4xbf16>
    %8 = vector.shape_cast %7 : vector<8x1x8x4xbf16> to vector<8x8x4xbf16>
    %9 = vector.extract_strided_slice %1 {offsets = [0, 1, 0, 4], sizes = [8, 1, 8, 4], strides = [1, 1, 1, 1]} : vector<8x2x8x8xbf16> to vector<8x1x8x4xbf16>
    %10 = vector.shape_cast %9 : vector<8x1x8x4xbf16> to vector<8x8x4xbf16>
    %11 = arith.maximumf %8, %10 : vector<8x8x4xbf16>
    %12 = arith.maximumf %6, %11 : vector<8x8x4xbf16>
    %13 = vector.extract_strided_slice %12 {offsets = [0, 7, 0], sizes = [8, 1, 4], strides = [1, 1, 1]} : vector<8x8x4xbf16> to vector<8x1x4xbf16>
    %14 = vector.extract_strided_slice %12 {offsets = [0, 0, 0], sizes = [8, 1, 4], strides = [1, 1, 1]} : vector<8x8x4xbf16> to vector<8x1x4xbf16>
    %15 = tpu.concatenate %13, %12, %14 in 1 : vector<8x1x4xbf16>, vector<8x8x4xbf16>, vector<8x1x4xbf16> -> vector<8x10x4xbf16>
    %16 = vector.extract_strided_slice %15 {offsets = [0, 0, 0], sizes = [1, 10, 4], strides = [1, 1, 1]} : vector<8x10x4xbf16> to vector<1x10x4xbf16>
    %17 = vector.extract_strided_slice %15 {offsets = [7, 0, 0], sizes = [1, 10, 4], strides = [1, 1, 1]} : vector<8x10x4xbf16> to vector<1x10x4xbf16>
    %18 = tpu.concatenate %16, %15, %17 in 0 : vector<1x10x4xbf16>, vector<8x10x4xbf16>, vector<1x10x4xbf16> -> vector<10x10x4xbf16>
    %19 = vector.extract_strided_slice %18 {offsets = [0, 0, 0], sizes = [10, 8, 4], strides = [1, 1, 1]} : vector<10x10x4xbf16> to vector<10x8x4xbf16>
    %20 = vector.shape_cast %19 : vector<10x8x4xbf16> to vector<80x4xbf16>
    %21 = vector.extract_strided_slice %18 {offsets = [0, 1, 0], sizes = [10, 8, 4], strides = [1, 1, 1]} : vector<10x10x4xbf16> to vector<10x8x4xbf16>
    %22 = vector.shape_cast %21 : vector<10x8x4xbf16> to vector<80x4xbf16>
    %23 = vector.extract_strided_slice %18 {offsets = [0, 2, 0], sizes = [10, 8, 4], strides = [1, 1, 1]} : vector<10x10x4xbf16> to vector<10x8x4xbf16>
    %24 = vector.shape_cast %23 : vector<10x8x4xbf16> to vector<80x4xbf16>
    %25 = vector.extract_strided_slice %20 {offsets = [0, 0], sizes = [64, 4], strides = [1, 1]} : vector<80x4xbf16> to vector<64x4xbf16>
    %c0_4 = arith.constant 0 : index
    %c0_5 = arith.constant 0 : index
    %c0_6 = arith.constant 0 : index
    %26 = vector.load %arg2[%c0_4, %c0_5, %c0_6] : memref<9x4x8xbf16, #tpu.memory_space<vmem>>, vector<1x4x8xbf16>
    %27 = vector.shape_cast %26 : vector<1x4x8xbf16> to vector<4x8xbf16>
    %cst = arith.constant dense<0.000000e+00> : vector<64x8xf32>
    %28 = tpu.matmul %25, %27, %cst {dimension_numbers = #tpu.dot_dimension_numbers<[1], [0], [0], [1], [0, 0, 1, 1], [], []>} : vector<64x4xbf16>, vector<4x8xbf16>, vector<64x8xf32> -> vector<64x8xf32>
    %29 = vector.extract_strided_slice %22 {offsets = [0, 0], sizes = [64, 4], strides = [1, 1]} : vector<80x4xbf16> to vector<64x4xbf16>
    %c1 = arith.constant 1 : index
    %c0_7 = arith.constant 0 : index
    %c0_8 = arith.constant 0 : index
    %30 = vector.load %arg2[%c1, %c0_7, %c0_8] : memref<9x4x8xbf16, #tpu.memory_space<vmem>>, vector<1x4x8xbf16>
    %31 = vector.shape_cast %30 : vector<1x4x8xbf16> to vector<4x8xbf16>
    %cst_9 = arith.constant dense<0.000000e+00> : vector<64x8xf32>
    %32 = tpu.matmul %29, %31, %cst_9 {dimension_numbers = #tpu.dot_dimension_numbers<[1], [0], [0], [1], [0, 0, 1, 1], [], []>} : vector<64x4xbf16>, vector<4x8xbf16>, vector<64x8xf32> -> vector<64x8xf32>
    %33 = arith.addf %28, %32 : vector<64x8xf32>
    %34 = vector.extract_strided_slice %24 {offsets = [0, 0], sizes = [64, 4], strides = [1, 1]} : vector<80x4xbf16> to vector<64x4xbf16>
    %c2 = arith.constant 2 : index
    %c0_10 = arith.constant 0 : index
    %c0_11 = arith.constant 0 : index
    %35 = vector.load %arg2[%c2, %c0_10, %c0_11] : memref<9x4x8xbf16, #tpu.memory_space<vmem>>, vector<1x4x8xbf16>
    %36 = vector.shape_cast %35 : vector<1x4x8xbf16> to vector<4x8xbf16>
    %cst_12 = arith.constant dense<0.000000e+00> : vector<64x8xf32>
    %37 = tpu.matmul %34, %36, %cst_12 {dimension_numbers = #tpu.dot_dimension_numbers<[1], [0], [0], [1], [0, 0, 1, 1], [], []>} : vector<64x4xbf16>, vector<4x8xbf16>, vector<64x8xf32> -> vector<64x8xf32>
    %38 = arith.addf %33, %37 : vector<64x8xf32>
    %39 = vector.extract_strided_slice %20 {offsets = [8, 0], sizes = [64, 4], strides = [1, 1]} : vector<80x4xbf16> to vector<64x4xbf16>
    %c3 = arith.constant 3 : index
    %c0_13 = arith.constant 0 : index
    %c0_14 = arith.constant 0 : index
    %40 = vector.load %arg2[%c3, %c0_13, %c0_14] : memref<9x4x8xbf16, #tpu.memory_space<vmem>>, vector<1x4x8xbf16>
    %41 = vector.shape_cast %40 : vector<1x4x8xbf16> to vector<4x8xbf16>
    %cst_15 = arith.constant dense<0.000000e+00> : vector<64x8xf32>
    %42 = tpu.matmul %39, %41, %cst_15 {dimension_numbers = #tpu.dot_dimension_numbers<[1], [0], [0], [1], [0, 0, 1, 1], [], []>} : vector<64x4xbf16>, vector<4x8xbf16>, vector<64x8xf32> -> vector<64x8xf32>
    %43 = arith.addf %38, %42 : vector<64x8xf32>
    %44 = vector.extract_strided_slice %22 {offsets = [8, 0], sizes = [64, 4], strides = [1, 1]} : vector<80x4xbf16> to vector<64x4xbf16>
    %c4 = arith.constant 4 : index
    %c0_16 = arith.constant 0 : index
    %c0_17 = arith.constant 0 : index
    %45 = vector.load %arg2[%c4, %c0_16, %c0_17] : memref<9x4x8xbf16, #tpu.memory_space<vmem>>, vector<1x4x8xbf16>
    %46 = vector.shape_cast %45 : vector<1x4x8xbf16> to vector<4x8xbf16>
    %cst_18 = arith.constant dense<0.000000e+00> : vector<64x8xf32>
    %47 = tpu.matmul %44, %46, %cst_18 {dimension_numbers = #tpu.dot_dimension_numbers<[1], [0], [0], [1], [0, 0, 1, 1], [], []>} : vector<64x4xbf16>, vector<4x8xbf16>, vector<64x8xf32> -> vector<64x8xf32>
    %48 = arith.addf %43, %47 : vector<64x8xf32>
    %49 = vector.extract_strided_slice %24 {offsets = [8, 0], sizes = [64, 4], strides = [1, 1]} : vector<80x4xbf16> to vector<64x4xbf16>
    %c5 = arith.constant 5 : index
    %c0_19 = arith.constant 0 : index
    %c0_20 = arith.constant 0 : index
    %50 = vector.load %arg2[%c5, %c0_19, %c0_20] : memref<9x4x8xbf16, #tpu.memory_space<vmem>>, vector<1x4x8xbf16>
    %51 = vector.shape_cast %50 : vector<1x4x8xbf16> to vector<4x8xbf16>
    %cst_21 = arith.constant dense<0.000000e+00> : vector<64x8xf32>
    %52 = tpu.matmul %49, %51, %cst_21 {dimension_numbers = #tpu.dot_dimension_numbers<[1], [0], [0], [1], [0, 0, 1, 1], [], []>} : vector<64x4xbf16>, vector<4x8xbf16>, vector<64x8xf32> -> vector<64x8xf32>
    %53 = arith.addf %48, %52 : vector<64x8xf32>
    %54 = vector.extract_strided_slice %20 {offsets = [16, 0], sizes = [64, 4], strides = [1, 1]} : vector<80x4xbf16> to vector<64x4xbf16>
    %c6 = arith.constant 6 : index
    %c0_22 = arith.constant 0 : index
    %c0_23 = arith.constant 0 : index
    %55 = vector.load %arg2[%c6, %c0_22, %c0_23] : memref<9x4x8xbf16, #tpu.memory_space<vmem>>, vector<1x4x8xbf16>
    %56 = vector.shape_cast %55 : vector<1x4x8xbf16> to vector<4x8xbf16>
    %cst_24 = arith.constant dense<0.000000e+00> : vector<64x8xf32>
    %57 = tpu.matmul %54, %56, %cst_24 {dimension_numbers = #tpu.dot_dimension_numbers<[1], [0], [0], [1], [0, 0, 1, 1], [], []>} : vector<64x4xbf16>, vector<4x8xbf16>, vector<64x8xf32> -> vector<64x8xf32>
    %58 = arith.addf %53, %57 : vector<64x8xf32>
    %59 = vector.extract_strided_slice %22 {offsets = [16, 0], sizes = [64, 4], strides = [1, 1]} : vector<80x4xbf16> to vector<64x4xbf16>
    %c7 = arith.constant 7 : index
    %c0_25 = arith.constant 0 : index
    %c0_26 = arith.constant 0 : index
    %60 = vector.load %arg2[%c7, %c0_25, %c0_26] : memref<9x4x8xbf16, #tpu.memory_space<vmem>>, vector<1x4x8xbf16>
    %61 = vector.shape_cast %60 : vector<1x4x8xbf16> to vector<4x8xbf16>
    %cst_27 = arith.constant dense<0.000000e+00> : vector<64x8xf32>
    %62 = tpu.matmul %59, %61, %cst_27 {dimension_numbers = #tpu.dot_dimension_numbers<[1], [0], [0], [1], [0, 0, 1, 1], [], []>} : vector<64x4xbf16>, vector<4x8xbf16>, vector<64x8xf32> -> vector<64x8xf32>
    %63 = arith.addf %58, %62 : vector<64x8xf32>
    %64 = vector.extract_strided_slice %24 {offsets = [16, 0], sizes = [64, 4], strides = [1, 1]} : vector<80x4xbf16> to vector<64x4xbf16>
    %c8 = arith.constant 8 : index
    %c0_28 = arith.constant 0 : index
    %c0_29 = arith.constant 0 : index
    %65 = vector.load %arg2[%c8, %c0_28, %c0_29] : memref<9x4x8xbf16, #tpu.memory_space<vmem>>, vector<1x4x8xbf16>
    %66 = vector.shape_cast %65 : vector<1x4x8xbf16> to vector<4x8xbf16>
    %cst_30 = arith.constant dense<0.000000e+00> : vector<64x8xf32>
    %67 = tpu.matmul %64, %66, %cst_30 {dimension_numbers = #tpu.dot_dimension_numbers<[1], [0], [0], [1], [0, 0, 1, 1], [], []>} : vector<64x4xbf16>, vector<4x8xbf16>, vector<64x8xf32> -> vector<64x8xf32>
    %68 = arith.addf %63, %67 : vector<64x8xf32>
    %cst_31 = arith.constant dense<0.000000e+00> : vector<8xf32>
    %69 = vector.multi_reduction <add>, %68, %cst_31 [0] : vector<64x8xf32> to vector<8xf32>
    %70 = vector.shape_cast %69 : vector<8xf32> to vector<1x8xf32>
    %cst_32 = arith.constant 1.562500e-02 : f32
    %71 = vector.broadcast %cst_32 : f32 to vector<1x8xf32>
    %72 = arith.mulf %70, %71 : vector<1x8xf32>
    %73 = vector.broadcast %72 : vector<1x8xf32> to vector<64x8xf32>
    %74 = arith.subf %68, %73 : vector<64x8xf32>
    %75 = arith.mulf %74, %74 : vector<64x8xf32>
    %cst_33 = arith.constant dense<0.000000e+00> : vector<8xf32>
    %76 = vector.multi_reduction <add>, %75, %cst_33 [0] : vector<64x8xf32> to vector<8xf32>
    %77 = vector.shape_cast %76 : vector<8xf32> to vector<1x8xf32>
    %cst_34 = arith.constant 1.562500e-02 : f32
    %78 = vector.broadcast %cst_34 : f32 to vector<1x8xf32>
    %79 = arith.mulf %77, %78 : vector<1x8xf32>
    %cst_35 = arith.constant 9.99999974E-6 : f32
    %80 = vector.broadcast %cst_35 : f32 to vector<1x8xf32>
    %81 = arith.addf %79, %80 : vector<1x8xf32>
    %82 = math.rsqrt %81 : vector<1x8xf32>
    %83 = vector.broadcast %82 : vector<1x8xf32> to vector<64x8xf32>
    %84 = arith.mulf %74, %83 : vector<64x8xf32>
    %cst_36 = arith.constant 0.000000e+00 : f32
    %85 = vector.broadcast %cst_36 : f32 to vector<64x8xf32>
    %86 = arith.maximumf %84, %85 : vector<64x8xf32>
    %87 = vector.shape_cast %86 : vector<64x8xf32> to vector<8x8x8xf32>
    %88 = arith.truncf %87 : vector<8x8x8xf32> to vector<8x8x8xbf16>
    %89 = vector.extract_strided_slice %88 {offsets = [0, 7, 0], sizes = [8, 1, 8], strides = [1, 1, 1]} : vector<8x8x8xbf16> to vector<8x1x8xbf16>
    %90 = vector.extract_strided_slice %88 {offsets = [0, 0, 0], sizes = [8, 1, 8], strides = [1, 1, 1]} : vector<8x8x8xbf16> to vector<8x1x8xbf16>
    %91 = tpu.concatenate %89, %88, %90 in 1 : vector<8x1x8xbf16>, vector<8x8x8xbf16>, vector<8x1x8xbf16> -> vector<8x10x8xbf16>
    %92 = vector.extract_strided_slice %91 {offsets = [0, 0, 0], sizes = [1, 10, 8], strides = [1, 1, 1]} : vector<8x10x8xbf16> to vector<1x10x8xbf16>
    %93 = vector.extract_strided_slice %91 {offsets = [7, 0, 0], sizes = [1, 10, 8], strides = [1, 1, 1]} : vector<8x10x8xbf16> to vector<1x10x8xbf16>
    %94 = tpu.concatenate %92, %91, %93 in 0 : vector<1x10x8xbf16>, vector<8x10x8xbf16>, vector<1x10x8xbf16> -> vector<10x10x8xbf16>
    %95 = vector.extract_strided_slice %94 {offsets = [0, 0, 0], sizes = [10, 8, 8], strides = [1, 1, 1]} : vector<10x10x8xbf16> to vector<10x8x8xbf16>
    %96 = vector.shape_cast %95 : vector<10x8x8xbf16> to vector<80x8xbf16>
    %97 = vector.extract_strided_slice %94 {offsets = [0, 1, 0], sizes = [10, 8, 8], strides = [1, 1, 1]} : vector<10x10x8xbf16> to vector<10x8x8xbf16>
    %98 = vector.shape_cast %97 : vector<10x8x8xbf16> to vector<80x8xbf16>
    %99 = vector.extract_strided_slice %94 {offsets = [0, 2, 0], sizes = [10, 8, 8], strides = [1, 1, 1]} : vector<10x10x8xbf16> to vector<10x8x8xbf16>
    %100 = vector.shape_cast %99 : vector<10x8x8xbf16> to vector<80x8xbf16>
    %101 = vector.extract_strided_slice %96 {offsets = [0, 0], sizes = [64, 8], strides = [1, 1]} : vector<80x8xbf16> to vector<64x8xbf16>
    %c0_37 = arith.constant 0 : index
    %c0_38 = arith.constant 0 : index
    %c0_39 = arith.constant 0 : index
    %102 = vector.load %arg3[%c0_37, %c0_38, %c0_39] : memref<9x8x8xbf16, #tpu.memory_space<vmem>>, vector<1x8x8xbf16>
    %103 = vector.shape_cast %102 : vector<1x8x8xbf16> to vector<8x8xbf16>
    %cst_40 = arith.constant dense<0.000000e+00> : vector<64x8xf32>
    %104 = tpu.matmul %101, %103, %cst_40 {dimension_numbers = #tpu.dot_dimension_numbers<[1], [0], [0], [1], [0, 0, 1, 1], [], []>} : vector<64x8xbf16>, vector<8x8xbf16>, vector<64x8xf32> -> vector<64x8xf32>
    %105 = vector.extract_strided_slice %98 {offsets = [0, 0], sizes = [64, 8], strides = [1, 1]} : vector<80x8xbf16> to vector<64x8xbf16>
    %c1_41 = arith.constant 1 : index
    %c0_42 = arith.constant 0 : index
    %c0_43 = arith.constant 0 : index
    %106 = vector.load %arg3[%c1_41, %c0_42, %c0_43] : memref<9x8x8xbf16, #tpu.memory_space<vmem>>, vector<1x8x8xbf16>
    %107 = vector.shape_cast %106 : vector<1x8x8xbf16> to vector<8x8xbf16>
    %cst_44 = arith.constant dense<0.000000e+00> : vector<64x8xf32>
    %108 = tpu.matmul %105, %107, %cst_44 {dimension_numbers = #tpu.dot_dimension_numbers<[1], [0], [0], [1], [0, 0, 1, 1], [], []>} : vector<64x8xbf16>, vector<8x8xbf16>, vector<64x8xf32> -> vector<64x8xf32>
    %109 = arith.addf %104, %108 : vector<64x8xf32>
    %110 = vector.extract_strided_slice %100 {offsets = [0, 0], sizes = [64, 8], strides = [1, 1]} : vector<80x8xbf16> to vector<64x8xbf16>
    %c2_45 = arith.constant 2 : index
    %c0_46 = arith.constant 0 : index
    %c0_47 = arith.constant 0 : index
    %111 = vector.load %arg3[%c2_45, %c0_46, %c0_47] : memref<9x8x8xbf16, #tpu.memory_space<vmem>>, vector<1x8x8xbf16>
    %112 = vector.shape_cast %111 : vector<1x8x8xbf16> to vector<8x8xbf16>
    %cst_48 = arith.constant dense<0.000000e+00> : vector<64x8xf32>
    %113 = tpu.matmul %110, %112, %cst_48 {dimension_numbers = #tpu.dot_dimension_numbers<[1], [0], [0], [1], [0, 0, 1, 1], [], []>} : vector<64x8xbf16>, vector<8x8xbf16>, vector<64x8xf32> -> vector<64x8xf32>
    %114 = arith.addf %109, %113 : vector<64x8xf32>
    %115 = vector.extract_strided_slice %96 {offsets = [8, 0], sizes = [64, 8], strides = [1, 1]} : vector<80x8xbf16> to vector<64x8xbf16>
    %c3_49 = arith.constant 3 : index
    %c0_50 = arith.constant 0 : index
    %c0_51 = arith.constant 0 : index
    %116 = vector.load %arg3[%c3_49, %c0_50, %c0_51] : memref<9x8x8xbf16, #tpu.memory_space<vmem>>, vector<1x8x8xbf16>
    %117 = vector.shape_cast %116 : vector<1x8x8xbf16> to vector<8x8xbf16>
    %cst_52 = arith.constant dense<0.000000e+00> : vector<64x8xf32>
    %118 = tpu.matmul %115, %117, %cst_52 {dimension_numbers = #tpu.dot_dimension_numbers<[1], [0], [0], [1], [0, 0, 1, 1], [], []>} : vector<64x8xbf16>, vector<8x8xbf16>, vector<64x8xf32> -> vector<64x8xf32>
    %119 = arith.addf %114, %118 : vector<64x8xf32>
    %120 = vector.extract_strided_slice %98 {offsets = [8, 0], sizes = [64, 8], strides = [1, 1]} : vector<80x8xbf16> to vector<64x8xbf16>
    %c4_53 = arith.constant 4 : index
    %c0_54 = arith.constant 0 : index
    %c0_55 = arith.constant 0 : index
    %121 = vector.load %arg3[%c4_53, %c0_54, %c0_55] : memref<9x8x8xbf16, #tpu.memory_space<vmem>>, vector<1x8x8xbf16>
    %122 = vector.shape_cast %121 : vector<1x8x8xbf16> to vector<8x8xbf16>
    %cst_56 = arith.constant dense<0.000000e+00> : vector<64x8xf32>
    %123 = tpu.matmul %120, %122, %cst_56 {dimension_numbers = #tpu.dot_dimension_numbers<[1], [0], [0], [1], [0, 0, 1, 1], [], []>} : vector<64x8xbf16>, vector<8x8xbf16>, vector<64x8xf32> -> vector<64x8xf32>
    %124 = arith.addf %119, %123 : vector<64x8xf32>
    %125 = vector.extract_strided_slice %100 {offsets = [8, 0], sizes = [64, 8], strides = [1, 1]} : vector<80x8xbf16> to vector<64x8xbf16>
    %c5_57 = arith.constant 5 : index
    %c0_58 = arith.constant 0 : index
    %c0_59 = arith.constant 0 : index
    %126 = vector.load %arg3[%c5_57, %c0_58, %c0_59] : memref<9x8x8xbf16, #tpu.memory_space<vmem>>, vector<1x8x8xbf16>
    %127 = vector.shape_cast %126 : vector<1x8x8xbf16> to vector<8x8xbf16>
    %cst_60 = arith.constant dense<0.000000e+00> : vector<64x8xf32>
    %128 = tpu.matmul %125, %127, %cst_60 {dimension_numbers = #tpu.dot_dimension_numbers<[1], [0], [0], [1], [0, 0, 1, 1], [], []>} : vector<64x8xbf16>, vector<8x8xbf16>, vector<64x8xf32> -> vector<64x8xf32>
    %129 = arith.addf %124, %128 : vector<64x8xf32>
    %130 = vector.extract_strided_slice %96 {offsets = [16, 0], sizes = [64, 8], strides = [1, 1]} : vector<80x8xbf16> to vector<64x8xbf16>
    %c6_61 = arith.constant 6 : index
    %c0_62 = arith.constant 0 : index
    %c0_63 = arith.constant 0 : index
    %131 = vector.load %arg3[%c6_61, %c0_62, %c0_63] : memref<9x8x8xbf16, #tpu.memory_space<vmem>>, vector<1x8x8xbf16>
    %132 = vector.shape_cast %131 : vector<1x8x8xbf16> to vector<8x8xbf16>
    %cst_64 = arith.constant dense<0.000000e+00> : vector<64x8xf32>
    %133 = tpu.matmul %130, %132, %cst_64 {dimension_numbers = #tpu.dot_dimension_numbers<[1], [0], [0], [1], [0, 0, 1, 1], [], []>} : vector<64x8xbf16>, vector<8x8xbf16>, vector<64x8xf32> -> vector<64x8xf32>
    %134 = arith.addf %129, %133 : vector<64x8xf32>
    %135 = vector.extract_strided_slice %98 {offsets = [16, 0], sizes = [64, 8], strides = [1, 1]} : vector<80x8xbf16> to vector<64x8xbf16>
    %c7_65 = arith.constant 7 : index
    %c0_66 = arith.constant 0 : index
    %c0_67 = arith.constant 0 : index
    %136 = vector.load %arg3[%c7_65, %c0_66, %c0_67] : memref<9x8x8xbf16, #tpu.memory_space<vmem>>, vector<1x8x8xbf16>
    %137 = vector.shape_cast %136 : vector<1x8x8xbf16> to vector<8x8xbf16>
    %cst_68 = arith.constant dense<0.000000e+00> : vector<64x8xf32>
    %138 = tpu.matmul %135, %137, %cst_68 {dimension_numbers = #tpu.dot_dimension_numbers<[1], [0], [0], [1], [0, 0, 1, 1], [], []>} : vector<64x8xbf16>, vector<8x8xbf16>, vector<64x8xf32> -> vector<64x8xf32>
    %139 = arith.addf %134, %138 : vector<64x8xf32>
    %140 = vector.extract_strided_slice %100 {offsets = [16, 0], sizes = [64, 8], strides = [1, 1]} : vector<80x8xbf16> to vector<64x8xbf16>
    %c8_69 = arith.constant 8 : index
    %c0_70 = arith.constant 0 : index
    %c0_71 = arith.constant 0 : index
    %141 = vector.load %arg3[%c8_69, %c0_70, %c0_71] : memref<9x8x8xbf16, #tpu.memory_space<vmem>>, vector<1x8x8xbf16>
    %142 = vector.shape_cast %141 : vector<1x8x8xbf16> to vector<8x8xbf16>
    %cst_72 = arith.constant dense<0.000000e+00> : vector<64x8xf32>
    %143 = tpu.matmul %140, %142, %cst_72 {dimension_numbers = #tpu.dot_dimension_numbers<[1], [0], [0], [1], [0, 0, 1, 1], [], []>} : vector<64x8xbf16>, vector<8x8xbf16>, vector<64x8xf32> -> vector<64x8xf32>
    %144 = arith.addf %139, %143 : vector<64x8xf32>
    %cst_73 = arith.constant dense<0.000000e+00> : vector<8xf32>
    %145 = vector.multi_reduction <add>, %144, %cst_73 [0] : vector<64x8xf32> to vector<8xf32>
    %146 = vector.shape_cast %145 : vector<8xf32> to vector<1x8xf32>
    %cst_74 = arith.constant 1.562500e-02 : f32
    %147 = vector.broadcast %cst_74 : f32 to vector<1x8xf32>
    %148 = arith.mulf %146, %147 : vector<1x8xf32>
    %149 = vector.broadcast %148 : vector<1x8xf32> to vector<64x8xf32>
    %150 = arith.subf %144, %149 : vector<64x8xf32>
    %151 = arith.mulf %150, %150 : vector<64x8xf32>
    %cst_75 = arith.constant dense<0.000000e+00> : vector<8xf32>
    %152 = vector.multi_reduction <add>, %151, %cst_75 [0] : vector<64x8xf32> to vector<8xf32>
    %153 = vector.shape_cast %152 : vector<8xf32> to vector<1x8xf32>
    %cst_76 = arith.constant 1.562500e-02 : f32
    %154 = vector.broadcast %cst_76 : f32 to vector<1x8xf32>
    %155 = arith.mulf %153, %154 : vector<1x8xf32>
    %cst_77 = arith.constant 9.99999974E-6 : f32
    %156 = vector.broadcast %cst_77 : f32 to vector<1x8xf32>
    %157 = arith.addf %155, %156 : vector<1x8xf32>
    %158 = math.rsqrt %157 : vector<1x8xf32>
    %159 = vector.broadcast %158 : vector<1x8xf32> to vector<64x8xf32>
    %160 = arith.mulf %150, %159 : vector<64x8xf32>
    %cst_78 = arith.constant 0.000000e+00 : f32
    %161 = vector.broadcast %cst_78 : f32 to vector<64x8xf32>
    %162 = arith.maximumf %160, %161 : vector<64x8xf32>
    %163 = arith.truncf %162 : vector<64x8xf32> to vector<64x8xbf16>
    %c0_79 = arith.constant 0 : index
    %c0_80 = arith.constant 0 : index
    %c0_81 = arith.constant 0 : index
    %164 = vector.load %arg4[%c0_79, %c0_80, %c0_81] : memref<1x64x8xbf16, #tpu.memory_space<vmem>>, vector<1x64x8xbf16>
    %165 = vector.shape_cast %164 : vector<1x64x8xbf16> to vector<64x8xbf16>
    %166 = vector.shape_cast %163 : vector<64x8xbf16> to vector<1x64x8xbf16>
    tpu.vector_store %arg4[%c0_79, %c0_80, %c0_81], %166 {strides = array<i32>} : memref<1x64x8xbf16, #tpu.memory_space<vmem>>, vector<1x64x8xbf16>,
    return
  }
  func.func @transform_0(%arg0: i32) -> (i32, i32, i32, i32, i32) {
    %c0_i32 = arith.constant 0 : i32
    %c0_i32_0 = arith.constant 0 : i32
    %c0_i32_1 = arith.constant 0 : i32
    %c0_i32_2 = arith.constant 0 : i32
    %c0_i32_3 = arith.constant 0 : i32
    return %arg0, %c0_i32, %c0_i32_0, %c0_i32_1, %c0_i32_2 : i32, i32, i32, i32, i32
  }
  func.func @transform_1(%arg0: i32) -> (i32, i32, i32) {
    %c0_i32 = arith.constant 0 : i32
    %c0_i32_0 = arith.constant 0 : i32
    %c0_i32_1 = arith.constant 0 : i32
    %c0_i32_2 = arith.constant 0 : i32
    return %c0_i32, %c0_i32_0, %c0_i32_1 : i32, i32, i32
  }
  func.func @transform_2(%arg0: i32) -> (i32, i32, i32) {
    %c0_i32 = arith.constant 0 : i32
    %c0_i32_0 = arith.constant 0 : i32
    %c0_i32_1 = arith.constant 0 : i32
    %c0_i32_2 = arith.constant 0 : i32
    return %c0_i32, %c0_i32_0, %c0_i32_1 : i32, i32, i32
  }
  func.func @transform_3(%arg0: i32) -> (i32, i32, i32) {
    %c0_i32 = arith.constant 0 : i32
    %c0_i32_0 = arith.constant 0 : i32
    %c0_i32_1 = arith.constant 0 : i32
    return %arg0, %c0_i32, %c0_i32_0 : i32, i32, i32
  }
}

</mosaic_0001>

<llo_original>
// kernel: down_forward.1
$region0: #{down_forward.1}
  #allocation0 [shape = 'u32[]', space=smem, size = 0x4, offset = 0x4, fixed_abs, tag = 'smem constant byte address 0x4 - core index']
  #allocation1 [shape = 'u32[144,128]{1,0:T(1,128)}', space=vmem, size = 0x12000, scoped, tag = 'internal scratch']
  %s0 = inlined_call_operand.hbm [shape: bf16[2,8,2,8,8], index: 0, kind: input, shape index: {}]
  %s1 = inlined_call_operand.hbm [shape: bf16[9,4,8], index: 1, kind: input, shape index: {}]
  %s2 = inlined_call_operand.hbm [shape: bf16[9,8,8], index: 2, kind: input, shape index: {}]
  %s3 = inlined_call_operand.hbm [shape: bf16[2,64,8], index: 3, kind: output, shape index: {}]
  %s4 = sld [smem:[#allocation0]]
  $region57: #{down_forward.1} parent=0
    _
  %s6 = ssub.s32 1, %s4
  %s7 = scalar_select 0, %s6, %s4
  $region1: #{down_forward.1} parent=0
    #allocation2 [shape = 'u8[65536]{0}', space=vmem, size = 0x10000, scoped, tag = 'input window, operand 0']
    #allocation3 [shape = 's32[2]{0}', space=sflag, size = 0x8, scoped, tag = 'scoped memory for down_forward.1']
    #allocation4 [shape = 's32[2]{0}', space=sflag, size = 0x8, scoped, tag = 'scoped memory for down_forward.1']
    #allocation5 [shape = 'u8[9216]{0}', space=vmem, size = 0x2400, scoped, tag = 'input window, operand 1, single buffered']
    #allocation6 [shape = 's32[1]{0}', space=sflag, size = 0x4, scoped, tag = 'scoped memory for down_forward.1']
    #allocation7 [shape = 'u8[18432]{0}', space=vmem, size = 0x4800, scoped, tag = 'input window, operand 2, single buffered']
    #allocation8 [shape = 'u8[32768]{0}', space=vmem, size = 0x8000, scoped, tag = 'output window, operand 0']
    %8 = vsyncpa [#allocation3], 0
    %s9 = scalar_lea.sflag [#allocation3], 1
    %10 = vsyncpa %s9, 0
    %11 = vsyncpa [#allocation6], 0
    %12 = vsyncpa [#allocation4], 0
    %s13 = scalar_lea.sflag [#allocation4], 1
    %14 = vsyncpa %s13, 0
    loop: start=0, step=1, limit=4
    $region2: #{down_forward.1} parent=1 // loop_pre_header
      _
    $region3: #{down_forward.1} parent=1 // loop_header
      %s16 = sphi 0, %s20
      %p17 = scmp.ge.s32.totalorder %s16, 4
      %s26 = sphi 0, %s28
      %s29 = sphi 0, %s26
      %s30 = sphi 0, %s29
      %s46 = sphi 0, %s30
      %s50 = sphi 0, %s50
      %s52 = sphi 0, %s50
      %s53 = sphi 0, %s52
      %s67 = sphi 0, %s53
      %s71 = sphi 0, %s71
      %s73 = sphi 0, %s71
      %s74 = sphi 0, %s73
      %s88 = sphi 0, %s74
      %s94 = sphi 0, %s96
      %s97 = sphi 0, %s94
      %s98 = sphi 0, %s97
      %s114 = sphi 0, %s98
    $region4: #{down_forward.1} parent=1 // loop_header_branch
      %19 = sbr.rel (%p17) target = $region8
    $region5: #{down_forward.1} parent=1 // loop_body
      %s21 = ssub.s32 %s16, 1
      %s22 = ssub.s32 %s16, 2
      %s23 = sadd.s32 %s16, 1
      %s24 = ssub.s32 %s16, %s23
      %p25 = scmp.eq.s32.totalorder %s24, 0
      %s27 = sadd.s32 %s26, 1
      %s28 = scalar_select %p25, %s26, %s27
      %p31 = pneg %p25
      %p32 = scmp.eq.s32.totalorder %s16, 1
      %p33 = por %p31, %p32
      %p34 = scmp.ne.s32.totalorder %s26, %s29
      %p35 = scmp.eq.s32.totalorder %s16, 0
      %p36 = por %p34, %p35
      %p37 = scmp.ne.s32.totalorder %s26, %s29
      %p38 = scmp.eq.s32.totalorder %s21, 1
      %p39 = por %p37, %p38
      %p40 = scmp.ne.s32.totalorder %s29, %s30
      %p41 = scmp.eq.s32.totalorder %s21, 0
      %p42 = por %p40, %p41
      %p43 = scmp.ne.s32.totalorder %s29, %s30
      %p44 = scmp.eq.s32.totalorder %s22, 1
      %p45 = por %p43, %p44
      %p47 = scmp.ne.s32.totalorder %s30, %s46
      %p48 = scmp.eq.s32.totalorder %s22, 0
      %p49 = por %p47, %p48
      %s51 = sadd.s32 %s50, 1
      %p54 = scmp.eq.s32.totalorder %s16, 1
      %p55 = scmp.ne.s32.totalorder %s50, %s52
      %p56 = scmp.eq.s32.totalorder %s16, 0
      %p57 = por %p55, %p56
      %p58 = scmp.ne.s32.totalorder %s50, %s52
      %p59 = scmp.eq.s32.totalorder %s21, 1
      %p60 = por %p58, %p59
      %p61 = scmp.ne.s32.totalorder %s52, %s53
      %p62 = scmp.eq.s32.totalorder %s21, 0
      %p63 = por %p61, %p62
      %p64 = scmp.ne.s32.totalorder %s52, %s53
      %p65 = scmp.eq.s32.totalorder %s22, 1
      %p66 = por %p64, %p65
      %p68 = scmp.ne.s32.totalorder %s53, %s67
      %p69 = scmp.eq.s32.totalorder %s22, 0
      %p70 = por %p68, %p69
      %s72 = sadd.s32 %s71, 1
      %p75 = scmp.eq.s32.totalorder %s16, 1
      %p76 = scmp.ne.s32.totalorder %s71, %s73
      %p77 = scmp.eq.s32.totalorder %s16, 0
      %p78 = por %p76, %p77
      %p79 = scmp.ne.s32.totalorder %s71, %s73
      %p80 = scmp.eq.s32.totalorder %s21, 1
      %p81 = por %p79, %p80
      %p82 = scmp.ne.s32.totalorder %s73, %s74
      %p83 = scmp.eq.s32.totalorder %s21, 0
      %p84 = por %p82, %p83
      %p85 = scmp.ne.s32.totalorder %s73, %s74
      %p86 = scmp.eq.s32.totalorder %s22, 1
      %p87 = por %p85, %p86
      %p89 = scmp.ne.s32.totalorder %s74, %s88
      %p90 = scmp.eq.s32.totalorder %s22, 0
      %p91 = por %p89, %p90
      %s92 = ssub.s32 %s16, %s23
      %p93 = scmp.eq.s32.totalorder %s92, 0
      %s95 = sadd.s32 %s94, 1
      %s96 = scalar_select %p93, %s94, %s95
      %p99 = pneg %p93
      %p100 = scmp.eq.s32.totalorder %s16, 1
      %p101 = por %p99, %p100
      %p102 = scmp.ne.s32.totalorder %s94, %s97
      %p103 = scmp.eq.s32.totalorder %s16, 0
      %p104 = por %p102, %p103
      %p105 = scmp.ne.s32.totalorder %s94, %s97
      %p106 = scmp.eq.s32.totalorder %s21, 1
      %p107 = por %p105, %p106
      %p108 = scmp.ne.s32.totalorder %s97, %s98
      %p109 = scmp.eq.s32.totalorder %s21, 0
      %p110 = por %p108, %p109
      %p111 = scmp.ne.s32.totalorder %s97, %s98
      %p112 = scmp.eq.s32.totalorder %s22, 1
      %p113 = por %p111, %p112
      %p115 = scmp.ne.s32.totalorder %s98, %s114
      %p116 = scmp.eq.s32.totalorder %s22, 0
      %p117 = por %p115, %p116
      %p118 = scmp.le.s32.totalorder 1, %s16
      %p119 = scmp.lt.s32.totalorder %s16, 3
      %p120 = pnand %p118, %p119
      %p121 = pneg %p120
      // Predicated region
      $region9: #{down_forward.1} parent=5 // pred_check
        _
      $region10: #{down_forward.1} parent=5 // pred_check_branch
        %123 = sbr.rel (%p120) target = $region12
      $region11: #{down_forward.1} parent=5 // pred_region
        %s124 = ssub.s32 %s16, 1
        // Predicated region
        $region13: #{down_forward.1} parent=11 // pred_check
          %p125 = pneg %p63
        $region14: #{down_forward.1} parent=11 // pred_check_branch
          %127 = sbr.rel (%p125) target = $region16
        $region15: #{down_forward.1} parent=11 // pred_region
          %s129 = ssub.s32 288, 288
          %130 = vsyncadd [#allocation6], %s129
          %s131 = sshll.u32 [#allocation5], 4
          %s132 = int_to_ptr.vmem [resolvable:$true] %s131
          %137 = dma.hbm_to_vmem [thread:$0]  %s1, 288, %s132, [#allocation6], 32, 32, 2
        $region16: #{down_forward.1} parent=11 // pred_fallthru
          _
        // Predicated region
        $region17: #{down_forward.1} parent=11 // pred_check
          %p138 = pneg %p84
        $region18: #{down_forward.1} parent=11 // pred_check_branch
          %140 = sbr.rel (%p138) target = $region20
        $region19: #{down_forward.1} parent=11 // pred_region
          %s142 = ssub.s32 576, 576
          %143 = vsyncadd [#allocation6], %s142
          %s144 = sshll.u32 [#allocation7], 4
          %s145 = int_to_ptr.vmem [resolvable:$true] %s144
          %150 = dma.hbm_to_vmem [thread:$0]  %s2, 576, %s145, [#allocation6], 64, 64, 4
        $region20: #{down_forward.1} parent=11 // pred_fallthru
          _
      $region12: #{down_forward.1} parent=5 // pred_fallthru
        _
      %p151 = scmp.lt.s32.totalorder %s16, 2
      // Predicated region
      $region21: #{down_forward.1} parent=5 // pred_check
        %p152 = pneg %p151
      $region22: #{down_forward.1} parent=5 // pred_check_branch
        %154 = sbr.rel (%p152) target = $region24
      $region23: #{down_forward.1} parent=5 // pred_region
        // Predicated region
        $region25: #{down_forward.1} parent=23 // pred_check
          %p155 = pneg %p36
        $region26: #{down_forward.1} parent=23 // pred_check_branch
          %157 = sbr.rel (%p155) target = $region28
        $region27: #{down_forward.1} parent=23 // pred_region
          %s158 = sand.u32 %s26, 1
          %s159 = scalar_lea.sflag [#allocation3], %s158
          %s160 = sand.u32 %s26, 1
          %s161 = smul.addr %s160, 64
          %s162 = scalar_lea.vmem [#allocation2], %s161
          %s164 = ssub.s32 1024, 1024
          %165 = vsyncadd %s159, %s164
          %s166 = smul.addr %s16, 16
          %s167 = smul.addr %s166, 64
          %s168 = scalar_lea.hbm %s0, %s167
          %s169 = sshll.u32 %s162, 4
          %s170 = int_to_ptr.vmem [resolvable:$true] %s169
          %175 = dma.hbm_to_vmem [thread:$0]  %s168, 1024, %s170, %s159, 64, 64, 4
        $region28: #{down_forward.1} parent=23 // pred_fallthru
          _
      $region24: #{down_forward.1} parent=5 // pred_fallthru
        _
      %p176 = scmp.le.s32.totalorder 1, %s16
      %p177 = scmp.lt.s32.totalorder %s16, 3
      %p178 = pnand %p176, %p177
      %p179 = pneg %p178
      // Predicated region
      $region29: #{down_forward.1} parent=5 // pred_check
        _
      $region30: #{down_forward.1} parent=5 // pred_check_branch
        %181 = sbr.rel (%p178) target = $region32
      $region31: #{down_forward.1} parent=5 // pred_region
        %s182 = ssub.s32 %s16, 1
        %s183 = sand.u32 %s29, 1
        %s184 = scalar_lea.sflag [#allocation3], %s183
        %s185 = sand.u32 %s29, 1
        %s186 = smul.addr %s185, 64
        %s187 = scalar_lea.vmem [#allocation2], %s186
        // Predicated region
        $region33: #{down_forward.1} parent=31 // pred_check
          %p188 = pneg %p42
        $region34: #{down_forward.1} parent=31 // pred_check_branch
          %190 = sbr.rel (%p188) target = $region36
        $region35: #{down_forward.1} parent=31 // pred_region
          %191 = dma.done %s184, 1024
        $region36: #{down_forward.1} parent=31 // pred_fallthru
          _
        // Predicated region
        $region37: #{down_forward.1} parent=31 // pred_check
          %p192 = pneg %p63
        $region38: #{down_forward.1} parent=31 // pred_check_branch
          %194 = sbr.rel (%p192) target = $region40
        $region39: #{down_forward.1} parent=31 // pred_region
          %195 = dma.done [#allocation6], 288
        $region40: #{down_forward.1} parent=31 // pred_fallthru
          _
        // Predicated region
        $region41: #{down_forward.1} parent=31 // pred_check
          %p196 = pneg %p84
        $region42: #{down_forward.1} parent=31 // pred_check_branch
          %198 = sbr.rel (%p196) target = $region44
        $region43: #{down_forward.1} parent=31 // pred_region
          %199 = dma.done [#allocation6], 576
        $region44: #{down_forward.1} parent=31 // pred_fallthru
          _
        %s200 = sand.u32 %s29, 1
        %s201 = scalar_lea.sflag [#allocation3], %s200
        %s202 = sand.u32 %s29, 1
        %s203 = smul.addr %s202, 64
        %s204 = scalar_lea.vmem [#allocation2], %s203
        %p205 = pneg %p42
        %p206 = pneg %p39
        %p207 = pneg %p63
        %p208 = pneg %p60
        %p209 = pneg %p84
        %p210 = pneg %p81
        %p211 = pneg %p110
        %p212 = pneg %p107
        %s213 = sand.u32 %s97, 1
        %s214 = scalar_lea.sflag [#allocation4], %s213
        %s215 = sand.u32 %s97, 1
        %s216 = smul.addr %s215, 32
        %s217 = scalar_lea.vmem [#allocation8], %s216
        %v219 = vld [vmem:[%s187] sm:$0xf]
        %v220 = vld [vmem:[%s187 + $0x4] sm:$0xf]
        %v221 = vld [vmem:[%s187 + $0x8] sm:$0xf]
        %v222 = vld [vmem:[%s187 + $0xc] sm:$0xf]
        %v223 = vld [vmem:[%s187 + $0x10] sm:$0xf]
        %v224 = vld [vmem:[%s187 + $0x14] sm:$0xf]
        %v225 = vld [vmem:[%s187 + $0x18] sm:$0xf]
        %v226 = vld [vmem:[%s187 + $0x1c] sm:$0xf]
        %v227 = vld [vmem:[%s187 + $0x20] sm:$0xf]
        %v228 = vld [vmem:[%s187 + $0x24] sm:$0xf]
        %v229 = vld [vmem:[%s187 + $0x28] sm:$0xf]
        %v230 = vld [vmem:[%s187 + $0x2c] sm:$0xf]
        %v231 = vld [vmem:[%s187 + $0x30] sm:$0xf]
        %v232 = vld [vmem:[%s187 + $0x34] sm:$0xf]
        %v233 = vld [vmem:[%s187 + $0x38] sm:$0xf]
        %v234 = vld [vmem:[%s187 + $0x3c] sm:$0xf]
        %243 = vrot.lane.b32.xlu0 %v219, 124
        %v244 = vpop.permute.xlu0 %243
        %245 = vrot.lane.b32.xlu0 %v221, 124
        %v246 = vpop.permute.xlu0 %245
        %247 = vrot.lane.b32.xlu0 %v223, 124
        %v248 = vpop.permute.xlu0 %247
        %249 = vrot.lane.b32.xlu0 %v225, 124
        %v250 = vpop.permute.xlu0 %249
        %251 = vrot.lane.b32.xlu0 %v227, 124
        %v252 = vpop.permute.xlu0 %251
        %253 = vrot.lane.b32.xlu0 %v229, 124
        %v254 = vpop.permute.xlu0 %253
        %255 = vrot.lane.b32.xlu0 %v231, 124
        %v256 = vpop.permute.xlu0 %255
        %257 = vrot.lane.b32.xlu0 %v233, 124
        %v258 = vpop.permute.xlu0 %257
        %v267 = vmax.bf16 %v219, %v244
        %v268 = vmax.bf16 %v221, %v246
        %v269 = vmax.bf16 %v223, %v248
        %v270 = vmax.bf16 %v225, %v250
        %v271 = vmax.bf16 %v227, %v252
        %v272 = vmax.bf16 %v229, %v254
        %v273 = vmax.bf16 %v231, %v256
        %v274 = vmax.bf16 %v233, %v258
        %283 = vrot.lane.b32.xlu0 %v220, 124
        %v284 = vpop.permute.xlu0 %283
        %285 = vrot.lane.b32.xlu0 %v222, 124
        %v286 = vpop.permute.xlu0 %285
        %287 = vrot.lane.b32.xlu0 %v224, 124
        %v288 = vpop.permute.xlu0 %287
        %289 = vrot.lane.b32.xlu0 %v226, 124
        %v290 = vpop.permute.xlu0 %289
        %291 = vrot.lane.b32.xlu0 %v228, 124
        %v292 = vpop.permute.xlu0 %291
        %293 = vrot.lane.b32.xlu0 %v230, 124
        %v294 = vpop.permute.xlu0 %293
        %295 = vrot.lane.b32.xlu0 %v232, 124
        %v296 = vpop.permute.xlu0 %295
        %297 = vrot.lane.b32.xlu0 %v234, 124
        %v298 = vpop.permute.xlu0 %297
        %v307 = vmax.bf16 %v220, %v284
        %v308 = vmax.bf16 %v222, %v286
        %v309 = vmax.bf16 %v224, %v288
        %v310 = vmax.bf16 %v226, %v290
        %v311 = vmax.bf16 %v228, %v292
        %v312 = vmax.bf16 %v230, %v294
        %v313 = vmax.bf16 %v232, %v296
        %v314 = vmax.bf16 %v234, %v298
        %v315 = vmax.bf16 %v267, %v307
        %v316 = vmax.bf16 %v268, %v308
        %v317 = vmax.bf16 %v269, %v309
        %v318 = vmax.bf16 %v270, %v310
        %v319 = vmax.bf16 %v271, %v311
        %v320 = vmax.bf16 %v272, %v312
        %v321 = vmax.bf16 %v273, %v313
        %v322 = vmax.bf16 %v274, %v314
        %v331 = vunpack.c.l.b16 %v315
        %v332 = vunpack.c.l.b16 %v316
        %v333 = vunpack.c.l.b16 %v317
        %v334 = vunpack.c.l.b16 %v318
        %v335 = vunpack.c.l.b16 %v319
        %v336 = vunpack.c.l.b16 %v320
        %v337 = vunpack.c.l.b16 %v321
        %v338 = vunpack.c.l.b16 %v322
        %v339 = vpack.c.b16 %v331, %v331
        %v340 = vpack.c.b16 %v332, %v332
        %v341 = vpack.c.b16 %v333, %v333
        %v342 = vpack.c.b16 %v334, %v334
        %v343 = vpack.c.b16 %v335, %v335
        %v344 = vpack.c.b16 %v336, %v336
        %v345 = vpack.c.b16 %v337, %v337
        %v346 = vpack.c.b16 %v338, %v338
        %v348 = vshrl.u32 %v339, 16
        %v350 = vrot.slane %v348, 3
        %v352 = vshrl.u32 %v340, 16
        %v354 = vrot.slane %v352, 3
        %v356 = vshrl.u32 %v341, 16
        %v358 = vrot.slane %v356, 3
        %v360 = vshrl.u32 %v342, 16
        %v362 = vrot.slane %v360, 3
        %v364 = vshrl.u32 %v343, 16
        %v366 = vrot.slane %v364, 3
        %v368 = vshrl.u32 %v344, 16
        %v370 = vrot.slane %v368, 3
        %v372 = vshrl.u32 %v345, 16
        %v374 = vrot.slane %v372, 3
        %v376 = vshrl.u32 %v346, 16
        %v378 = vrot.slane %v376, 3
        %v387 = vrot.slane %v348, 7
        %v388 = vshll.u32 %v339, 16
        %v390 = vor.u32 %v387, %v388
        %v391 = vrot.slane %v352, 7
        %v392 = vshll.u32 %v340, 16
        %v394 = vor.u32 %v391, %v392
        %v395 = vrot.slane %v356, 7
        %v396 = vshll.u32 %v341, 16
        %v398 = vor.u32 %v395, %v396
        %v399 = vrot.slane %v360, 7
        %v400 = vshll.u32 %v342, 16
        %v402 = vor.u32 %v399, %v400
        %v403 = vrot.slane %v364, 7
        %v404 = vshll.u32 %v343, 16
        %v406 = vor.u32 %v403, %v404
        %v407 = vrot.slane %v368, 7
        %v408 = vshll.u32 %v344, 16
        %v410 = vor.u32 %v407, %v408
        %v411 = vrot.slane %v372, 7
        %v412 = vshll.u32 %v345, 16
        %v414 = vor.u32 %v411, %v412
        %v415 = vrot.slane %v376, 7
        %v416 = vshll.u32 %v346, 16
        %v418 = vor.u32 %v415, %v416
        %v427 = vrot.slane %v388, 4
        %v428 = vrot.slane %v392, 4
        %v429 = vrot.slane %v396, 4
        %v430 = vrot.slane %v400, 4
        %v431 = vrot.slane %v404, 4
        %v432 = vrot.slane %v408, 4
        %v433 = vrot.slane %v412, 4
        %v434 = vrot.slane %v416, 4
        %vm443 = vcmask 1040384
        %vm444 = vsmask.f32 256
        %vm445 = vmand %vm443, %vm444
        %v446 = vsel %vm445, %v350, %v390
        %v447 = vsel %vm445, %v354, %v394
        %v448 = vsel %vm445, %v358, %v398
        %v449 = vsel %vm445, %v362, %v402
        %v450 = vsel %vm445, %v366, %v406
        %v451 = vsel %vm445, %v370, %v410
        %v452 = vsel %vm445, %v374, %v414
        %v453 = vsel %vm445, %v378, %v418
        %vm454 = vcmask 1044480
        %vm455 = vsmask.f32 4352
        %vm456 = vmand %vm454, %vm455
        %v457 = vsel %vm456, %v446, %v427
        %v458 = vsel %vm456, %v447, %v428
        %v459 = vsel %vm456, %v448, %v429
        %v460 = vsel %vm456, %v449, %v430
        %v461 = vsel %vm456, %v450, %v431
        %v462 = vsel %vm456, %v451, %v432
        %v463 = vsel %vm456, %v452, %v433
        %v464 = vsel %vm456, %v453, %v434
        %v473 = vunpack.c.l.b16 %v457
        %v474 = vunpack.c.h.b16 %v457
        %v475 = vunpack.c.l.b16 %v458
        %v476 = vunpack.c.h.b16 %v458
        %v477 = vunpack.c.l.b16 %v459
        %v478 = vunpack.c.h.b16 %v459
        %v479 = vunpack.c.l.b16 %v460
        %v480 = vunpack.c.h.b16 %v460
        %v481 = vunpack.c.l.b16 %v461
        %v482 = vunpack.c.h.b16 %v461
        %v483 = vunpack.c.l.b16 %v462
        %v484 = vunpack.c.h.b16 %v462
        %v485 = vunpack.c.l.b16 %v463
        %v486 = vunpack.c.h.b16 %v463
        %v487 = vunpack.c.l.b16 %v464
        %v488 = vunpack.c.h.b16 %v464
        %v489 = vpack.c.b16 %v473, %v473
        %v490 = vpack.c.b16 %v474, %v474
        %v491 = vpack.c.b16 %v475, %v475
        %v492 = vpack.c.b16 %v476, %v476
        %v493 = vpack.c.b16 %v477, %v477
        %v494 = vpack.c.b16 %v478, %v478
        %v495 = vpack.c.b16 %v479, %v479
        %v496 = vpack.c.b16 %v480, %v480
        %v497 = vpack.c.b16 %v481, %v481
        %v498 = vpack.c.b16 %v482, %v482
        %v499 = vpack.c.b16 %v483, %v483
        %v500 = vpack.c.b16 %v484, %v484
        %v501 = vpack.c.b16 %v485, %v485
        %v502 = vpack.c.b16 %v486, %v486
        %v503 = vpack.c.b16 %v487, %v487
        %v504 = vpack.c.b16 %v488, %v488
        %vm505 = vsmask.f32 3328
        %vm506 = vsmask.f32 7440
        %vm507 = vmor %vm505, %vm506
        %v509 = vshrl.u32 %v489, 16
        %v511 = vrot.slane %v509, 4
        %v512 = vshll.u32 %v489, 16
        %v514 = vrot.slane %v512, 5
        %v515 = vor.u32 %v511, %v514
        %v516 = vrot.slane %v515, 4
        %v518 = vshll.u32 %v490, 16
        %v520 = vrot.slane %v518, 5
        %v521 = vsel %vm507, %v516, %v520
        %v523 = vshrl.u32 %v491, 16
        %v525 = vrot.slane %v523, 4
        %v526 = vshll.u32 %v491, 16
        %v528 = vrot.slane %v526, 5
        %v529 = vor.u32 %v525, %v528
        %v530 = vrot.slane %v529, 4
        %v532 = vshll.u32 %v492, 16
        %v534 = vrot.slane %v532, 5
        %v535 = vsel %vm507, %v530, %v534
        %v537 = vshrl.u32 %v493, 16
        %v539 = vrot.slane %v537, 4
        %v540 = vshll.u32 %v493, 16
        %v542 = vrot.slane %v540, 5
        %v543 = vor.u32 %v539, %v542
        %v544 = vrot.slane %v543, 4
        %v546 = vshll.u32 %v494, 16
        %v548 = vrot.slane %v546, 5
        %v549 = vsel %vm507, %v544, %v548
        %v551 = vshrl.u32 %v495, 16
        %v553 = vrot.slane %v551, 4
        %v554 = vshll.u32 %v495, 16
        %v556 = vrot.slane %v554, 5
        %v557 = vor.u32 %v553, %v556
        %v558 = vrot.slane %v557, 4
        %v560 = vshll.u32 %v496, 16
        %v562 = vrot.slane %v560, 5
        %v563 = vsel %vm507, %v558, %v562
        %v565 = vshrl.u32 %v497, 16
        %v567 = vrot.slane %v565, 4
        %v568 = vshll.u32 %v497, 16
        %v570 = vrot.slane %v568, 5
        %v571 = vor.u32 %v567, %v570
        %v572 = vrot.slane %v571, 4
        %v574 = vshll.u32 %v498, 16
        %v576 = vrot.slane %v574, 5
        %v577 = vsel %vm507, %v572, %v576
        %v579 = vshrl.u32 %v499, 16
        %v581 = vrot.slane %v579, 4
        %v582 = vshll.u32 %v499, 16
        %v584 = vrot.slane %v582, 5
        %v585 = vor.u32 %v581, %v584
        %v586 = vrot.slane %v585, 4
        %v588 = vshll.u32 %v500, 16
        %v590 = vrot.slane %v588, 5
        %v591 = vsel %vm507, %v586, %v590
        %v593 = vshrl.u32 %v501, 16
        %v595 = vrot.slane %v593, 4
        %v596 = vshll.u32 %v501, 16
        %v598 = vrot.slane %v596, 5
        %v599 = vor.u32 %v595, %v598
        %v600 = vrot.slane %v599, 4
        %v602 = vshll.u32 %v502, 16
        %v604 = vrot.slane %v602, 5
        %v605 = vsel %vm507, %v600, %v604
        %v607 = vshrl.u32 %v503, 16
        %v609 = vrot.slane %v607, 4
        %v610 = vshll.u32 %v503, 16
        %v612 = vrot.slane %v610, 5
        %v613 = vor.u32 %v609, %v612
        %v614 = vrot.slane %v613, 4
        %v616 = vshll.u32 %v504, 16
        %v618 = vrot.slane %v616, 5
        %v619 = vsel %vm507, %v614, %v618
        %vm620 = vcmask 1042432
        %vm621 = vcmask 1046532
        %vm622 = vmor %vm620, %vm621
        %v623 = vrot.slane %v489, 5
        %v624 = vrot.slane %v623, 4
        %v625 = vrot.slane %v490, 5
        %v626 = vsel %vm622, %v624, %v625
        %v627 = vrot.slane %v491, 5
        %v628 = vrot.slane %v627, 4
        %v629 = vrot.slane %v492, 5
        %v630 = vsel %vm622, %v628, %v629
        %v631 = vrot.slane %v493, 5
        %v632 = vrot.slane %v631, 4
        %v633 = vrot.slane %v494, 5
        %v634 = vsel %vm622, %v632, %v633
        %v635 = vrot.slane %v495, 5
        %v636 = vrot.slane %v635, 4
        %v637 = vrot.slane %v496, 5
        %v638 = vsel %vm622, %v636, %v637
        %v639 = vrot.slane %v497, 5
        %v640 = vrot.slane %v639, 4
        %v641 = vrot.slane %v498, 5
        %v642 = vsel %vm622, %v640, %v641
        %v643 = vrot.slane %v499, 5
        %v644 = vrot.slane %v643, 4
        %v645 = vrot.slane %v500, 5
        %v646 = vsel %vm622, %v644, %v645
        %v647 = vrot.slane %v501, 5
        %v648 = vrot.slane %v647, 4
        %v649 = vrot.slane %v502, 5
        %v650 = vsel %vm622, %v648, %v649
        %v651 = vrot.slane %v503, 5
        %v652 = vrot.slane %v651, 4
        %v653 = vrot.slane %v504, 5
        %v654 = vsel %vm622, %v652, %v653
        %v655 = vld [vmem:[#allocation5] sm:$0x3]
        %s656 = scalar_lea.vmem [#allocation5], 2
        %v657 = vld [vmem:[%s656] sm:$0x3]
        %v658 = vunpack.c.l.b16 %v521
        %v659 = vunpack.c.l.b16 %v535
        %v660 = vunpack.c.l.b16 %v549
        %v661 = vunpack.c.l.b16 %v563
        %v662 = vunpack.c.l.b16 %v577
        %v663 = vunpack.c.l.b16 %v591
        %v664 = vunpack.c.l.b16 %v605
        %v665 = vpack.c.b16 %v658, %v658
        %v666 = vpack.c.b16 %v660, %v659
        %v667 = vpack.c.b16 %v662, %v661
        %v668 = vpack.c.b16 %v664, %v663
        %vm669 = vcmask 31744
        %v671 = vsel %vm669, %v665, 0
        %v674 = vsel %vm669, %v666, 0
        %v677 = vsel %vm669, %v667, 0
        %v680 = vsel %vm669, %v668, 0
        %vm682 = vcmask 1041408
        %v684 = vsel %vm682, %v657, 0
        %686 = vmatprep.subr.bf16.mxu0 0
        %687 = vmatpush1.bf16.msra.mxu0 %v684
        %688 = vmatprep.subr.bf16.mxu0 0
        %689 = vmatpush1.bf16.msra.mxu0 0
        %690 = vmatprep.subr.bf16.mxu0 0
        %691 = vmatpush1.bf16.msra.mxu0 0
        %692 = vmatprep.subr.bf16.mxu0 0
        %693 = vmatpush1.bf16.msra.mxu0 0
        %694 = vmatprep.subr.bf16.mxu0 0
        %695 = vmatpush1.bf16.msra.mxu0 0
        %696 = vmatprep.subr.bf16.mxu0 0
        %697 = vmatpush1.bf16.msra.mxu0 0
        %698 = vmatprep.subr.bf16.mxu0 0
        %699 = vmatpush1.bf16.msra.mxu0 0
        %700 = vmatprep.subr.bf16.mxu0 0
        %701 = vmatpush1.bf16.msra.mxu0 0
        %702 = vmatprep.subr.bf16.mxu0 0
        %703 = vmatpush1.bf16.msra.mxu0 0
        %704 = vmatprep.subr.bf16.mxu0 0
        %705 = vmatpush1.bf16.msra.mxu0 0
        %706 = vmatprep.subr.bf16.mxu0 0
        %707 = vmatpush1.bf16.msra.mxu0 0
        %708 = vmatprep.subr.bf16.mxu0 0
        %709 = vmatpush1.bf16.msra.mxu0 0
        %710 = vmatprep.subr.bf16.mxu0 0
        %711 = vmatpush1.bf16.msra.mxu0 0
        %712 = vmatprep.subr.bf16.mxu0 0
        %713 = vmatpush1.bf16.msra.mxu0 0
        %714 = vmatprep.subr.bf16.mxu0 0
        %715 = vmatpush1.bf16.msra.mxu0 0
        %716 = vmatprep.subr.bf16.mxu0 0
        %717 = vmatpush1.bf16.msra.mxu0 0
        %718 = vmatprep.mubr.bf16.mxu0 0
        %719 = vmatmul.mubr.bf16.gmra.mrb[0].mxu0 %v671
        %v720 = vpop.f32.mrb[0].mxu0
        %v721 = vadd.f32 0.0, %v720
        %v722 = vpop.f32.mrb[0].mxu0
        %v723 = vpop.f32.mrb[0].mxu0
        %v724 = vadd.f32 0.0, %v723
        %v725 = vpop.f32.mrb[0].mxu0
        %726 = vmatprep.mubr.bf16.mxu0 0
        %727 = vmatmul.mubr.bf16.gmra.mrb[0].mxu0 %v674
        %v728 = vpop.f32.mrb[0].mxu0
        %v729 = vadd.f32 0.0, %v728
        %v730 = vpop.f32.mrb[0].mxu0
        %v731 = vpop.f32.mrb[0].mxu0
        %v732 = vadd.f32 0.0, %v731
        %v733 = vpop.f32.mrb[0].mxu0
        %734 = vmatprep.mubr.bf16.mxu0 0
        %735 = vmatmul.mubr.bf16.gmra.mrb[0].mxu0 %v677
        %v736 = vpop.f32.mrb[0].mxu0
        %v737 = vadd.f32 0.0, %v736
        %v738 = vpop.f32.mrb[0].mxu0
        %v739 = vpop.f32.mrb[0].mxu0
        %v740 = vadd.f32 0.0, %v739
        %v741 = vpop.f32.mrb[0].mxu0
        %742 = vmatprep.mubr.bf16.mxu0 0
        %743 = vmatmul.mubr.bf16.gmra.mrb[0].mxu0 %v680
        %v744 = vpop.f32.mrb[0].mxu0
        %v745 = vadd.f32 0.0, %v744
        %v746 = vpop.f32.mrb[0].mxu0
        %v747 = vpop.f32.mrb[0].mxu0
        %v748 = vadd.f32 0.0, %v747
        %v749 = vpop.f32.mrb[0].mxu0
        %750 = vdwg.mxu0
        %v751 = vpack.c.b16 %v477, %v475
        %v752 = vpack.c.b16 %v481, %v479
        %v753 = vpack.c.b16 %v485, %v483
        %v754 = vsel %vm669, %v489, 0
        %v757 = vsel %vm669, %v751, 0
        %v760 = vsel %vm669, %v752, 0
        %v763 = vsel %vm669, %v753, 0
        %v766 = vsel %vm682, %v655, 0
        %768 = vmatprep.subr.bf16.mxu0 0
        %769 = vmatpush1.bf16.msra.mxu0 %v766
        %770 = vmatprep.subr.bf16.mxu0 0
        %771 = vmatpush1.bf16.msra.mxu0 0
        %772 = vmatprep.subr.bf16.mxu0 0
        %773 = vmatpush1.bf16.msra.mxu0 0
        %774 = vmatprep.subr.bf16.mxu0 0
        %775 = vmatpush1.bf16.msra.mxu0 0
        %776 = vmatprep.subr.bf16.mxu0 0
        %777 = vmatpush1.bf16.msra.mxu0 0
        %778 = vmatprep.subr.bf16.mxu0 0
        %779 = vmatpush1.bf16.msra.mxu0 0
        %780 = vmatprep.subr.bf16.mxu0 0
        %781 = vmatpush1.bf16.msra.mxu0 0
        %782 = vmatprep.subr.bf16.mxu0 0
        %783 = vmatpush1.bf16.msra.mxu0 0
        %784 = vmatprep.subr.bf16.mxu0 0
        %785 = vmatpush1.bf16.msra.mxu0 0
        %786 = vmatprep.subr.bf16.mxu0 0
        %787 = vmatpush1.bf16.msra.mxu0 0
        %788 = vmatprep.subr.bf16.mxu0 0
        %789 = vmatpush1.bf16.msra.mxu0 0
        %790 = vmatprep.subr.bf16.mxu0 0
        %791 = vmatpush1.bf16.msra.mxu0 0
        %792 = vmatprep.subr.bf16.mxu0 0
        %793 = vmatpush1.bf16.msra.mxu0 0
        %794 = vmatprep.subr.bf16.mxu0 0
        %795 = vmatpush1.bf16.msra.mxu0 0
        %796 = vmatprep.subr.bf16.mxu0 0
        %797 = vmatpush1.bf16.msra.mxu0 0
        %798 = vmatprep.subr.bf16.mxu0 0
        %799 = vmatpush1.bf16.msra.mxu0 0
        %800 = vmatprep.mubr.bf16.mxu0 0
        %801 = vmatmul.mubr.bf16.gmra.mrb[0].mxu0 %v754
        %v802 = vpop.f32.mrb[0].mxu0
        %v803 = vadd.f32 %v721, %v802
        %v804 = vpop.f32.mrb[0].mxu0
        %v805 = vpop.f32.mrb[0].mxu0
        %v806 = vadd.f32 %v724, %v805
        %v807 = vpop.f32.mrb[0].mxu0
        %808 = vmatprep.mubr.bf16.mxu0 0
        %809 = vmatmul.mubr.bf16.gmra.mrb[0].mxu0 %v757
        %v810 = vpop.f32.mrb[0].mxu0
        %v811 = vadd.f32 %v729, %v810
        %v812 = vpop.f32.mrb[0].mxu0
        %v813 = vpop.f32.mrb[0].mxu0
        %v814 = vadd.f32 %v732, %v813
        %v815 = vpop.f32.mrb[0].mxu0
        %816 = vmatprep.mubr.bf16.mxu0 0
        %817 = vmatmul.mubr.bf16.gmra.mrb[0].mxu0 %v760
        %v818 = vpop.f32.mrb[0].mxu0
        %v819 = vadd.f32 %v737, %v818
        %v820 = vpop.f32.mrb[0].mxu0
        %v821 = vpop.f32.mrb[0].mxu0
        %v822 = vadd.f32 %v740, %v821
        %v823 = vpop.f32.mrb[0].mxu0
        %824 = vmatprep.mubr.bf16.mxu0 0
        %825 = vmatmul.mubr.bf16.gmra.mrb[0].mxu0 %v763
        %v826 = vpop.f32.mrb[0].mxu0
        %v827 = vadd.f32 %v745, %v826
        %v828 = vpop.f32.mrb[0].mxu0
        %v829 = vpop.f32.mrb[0].mxu0
        %v830 = vadd.f32 %v748, %v829
        %v831 = vpop.f32.mrb[0].mxu0
        %832 = vdwg.mxu0
        %s833 = scalar_lea.vmem [#allocation5], 4
        %v834 = vld [vmem:[%s833] sm:$0x3]
        %v835 = vunpack.c.l.b16 %v626
        %v836 = vunpack.c.l.b16 %v630
        %v837 = vunpack.c.l.b16 %v634
        %v838 = vunpack.c.l.b16 %v638
        %v839 = vunpack.c.l.b16 %v642
        %v840 = vunpack.c.l.b16 %v646
        %v841 = vunpack.c.l.b16 %v650
        %v842 = vpack.c.b16 %v835, %v835
        %v843 = vpack.c.b16 %v837, %v836
        %v844 = vpack.c.b16 %v839, %v838
        %v845 = vpack.c.b16 %v841, %v840
        %v847 = vsel %vm669, %v842, 0
        %v850 = vsel %vm669, %v843, 0
        %v853 = vsel %vm669, %v844, 0
        %v856 = vsel %vm669, %v845, 0
        %v859 = vsel %vm682, %v834, 0
        %861 = vmatprep.subr.bf16.mxu0 0
        %862 = vmatpush1.bf16.msra.mxu0 %v859
        %863 = vmatprep.subr.bf16.mxu0 0
        %864 = vmatpush1.bf16.msra.mxu0 0
        %865 = vmatprep.subr.bf16.mxu0 0
        %866 = vmatpush1.bf16.msra.mxu0 0
        %867 = vmatprep.subr.bf16.mxu0 0
        %868 = vmatpush1.bf16.msra.mxu0 0
        %869 = vmatprep.subr.bf16.mxu0 0
        %870 = vmatpush1.bf16.msra.mxu0 0
        %871 = vmatprep.subr.bf16.mxu0 0
        %872 = vmatpush1.bf16.msra.mxu0 0
        %873 = vmatprep.subr.bf16.mxu0 0
        %874 = vmatpush1.bf16.msra.mxu0 0
        %875 = vmatprep.subr.bf16.mxu0 0
        %876 = vmatpush1.bf16.msra.mxu0 0
        %877 = vmatprep.subr.bf16.mxu0 0
        %878 = vmatpush1.bf16.msra.mxu0 0
        %879 = vmatprep.subr.bf16.mxu0 0
        %880 = vmatpush1.bf16.msra.mxu0 0
        %881 = vmatprep.subr.bf16.mxu0 0
        %882 = vmatpush1.bf16.msra.mxu0 0
        %883 = vmatprep.subr.bf16.mxu0 0
        %884 = vmatpush1.bf16.msra.mxu0 0
        %885 = vmatprep.subr.bf16.mxu0 0
        %886 = vmatpush1.bf16.msra.mxu0 0
        %887 = vmatprep.subr.bf16.mxu0 0
        %888 = vmatpush1.bf16.msra.mxu0 0
        %889 = vmatprep.subr.bf16.mxu0 0
        %890 = vmatpush1.bf16.msra.mxu0 0
        %891 = vmatprep.subr.bf16.mxu0 0
        %892 = vmatpush1.bf16.msra.mxu0 0
        %893 = vmatprep.mubr.bf16.mxu0 0
        %894 = vmatmul.mubr.bf16.gmra.mrb[0].mxu0 %v847
        %v895 = vpop.f32.mrb[0].mxu0
        %v896 = vadd.f32 0.0, %v895
        %v897 = vpop.f32.mrb[0].mxu0
        %v898 = vpop.f32.mrb[0].mxu0
        %v899 = vadd.f32 0.0, %v898
        %v900 = vpop.f32.mrb[0].mxu0
        %901 = vmatprep.mubr.bf16.mxu0 0
        %902 = vmatmul.mubr.bf16.gmra.mrb[0].mxu0 %v850
        %v903 = vpop.f32.mrb[0].mxu0
        %v904 = vadd.f32 0.0, %v903
        %v905 = vpop.f32.mrb[0].mxu0
        %v906 = vpop.f32.mrb[0].mxu0
        %v907 = vadd.f32 0.0, %v906
        %v908 = vpop.f32.mrb[0].mxu0
        %909 = vmatprep.mubr.bf16.mxu0 0
        %910 = vmatmul.mubr.bf16.gmra.mrb[0].mxu0 %v853
        %v911 = vpop.f32.mrb[0].mxu0
        %v912 = vadd.f32 0.0, %v911
        %v913 = vpop.f32.mrb[0].mxu0
        %v914 = vpop.f32.mrb[0].mxu0
        %v915 = vadd.f32 0.0, %v914
        %v916 = vpop.f32.mrb[0].mxu0
        %917 = vmatprep.mubr.bf16.mxu0 0
        %918 = vmatmul.mubr.bf16.gmra.mrb[0].mxu0 %v856
        %v919 = vpop.f32.mrb[0].mxu0
        %v920 = vadd.f32 0.0, %v919
        %v921 = vpop.f32.mrb[0].mxu0
        %v922 = vpop.f32.mrb[0].mxu0
        %v923 = vadd.f32 0.0, %v922
        %v924 = vpop.f32.mrb[0].mxu0
        %925 = vdwg.mxu0
        %v926 = vadd.f32 %v803, %v896
        %v927 = vadd.f32 %v806, %v899
        %v928 = vadd.f32 %v811, %v904
        %v929 = vadd.f32 %v814, %v907
        %v930 = vadd.f32 %v819, %v912
        %v931 = vadd.f32 %v822, %v915
        %v932 = vadd.f32 %v827, %v920
        %v933 = vadd.f32 %v830, %v923
        %s934 = scalar_lea.vmem [#allocation5], 6
        %v935 = vld [vmem:[%s934] sm:$0x3]
        %v936 = vpack.c.b16 %v475, %v473
        %v937 = vpack.c.b16 %v479, %v477
        %v938 = vpack.c.b16 %v483, %v481
        %v939 = vpack.c.b16 %v487, %v485
        %v941 = vsel %vm669, %v936, 0
        %v944 = vsel %vm669, %v937, 0
        %v947 = vsel %vm669, %v938, 0
        %v950 = vsel %vm669, %v939, 0
        %v953 = vsel %vm682, %v935, 0
        %955 = vmatprep.subr.bf16.mxu0 0
        %956 = vmatpush1.bf16.msra.mxu0 %v953
        %957 = vmatprep.subr.bf16.mxu0 0
        %958 = vmatpush1.bf16.msra.mxu0 0
        %959 = vmatprep.subr.bf16.mxu0 0
        %960 = vmatpush1.bf16.msra.mxu0 0
        %961 = vmatprep.subr.bf16.mxu0 0
        %962 = vmatpush1.bf16.msra.mxu0 0
        %963 = vmatprep.subr.bf16.mxu0 0
        %964 = vmatpush1.bf16.msra.mxu0 0
        %965 = vmatprep.subr.bf16.mxu0 0
        %966 = vmatpush1.bf16.msra.mxu0 0
        %967 = vmatprep.subr.bf16.mxu0 0
        %968 = vmatpush1.bf16.msra.mxu0 0
        %969 = vmatprep.subr.bf16.mxu0 0
        %970 = vmatpush1.bf16.msra.mxu0 0
        %971 = vmatprep.subr.bf16.mxu0 0
        %972 = vmatpush1.bf16.msra.mxu0 0
        %973 = vmatprep.subr.bf16.mxu0 0
        %974 = vmatpush1.bf16.msra.mxu0 0
        %975 = vmatprep.subr.bf16.mxu0 0
        %976 = vmatpush1.bf16.msra.mxu0 0
        %977 = vmatprep.subr.bf16.mxu0 0
        %978 = vmatpush1.bf16.msra.mxu0 0
        %979 = vmatprep.subr.bf16.mxu0 0
        %980 = vmatpush1.bf16.msra.mxu0 0
        %981 = vmatprep.subr.bf16.mxu0 0
        %982 = vmatpush1.bf16.msra.mxu0 0
        %983 = vmatprep.subr.bf16.mxu0 0
        %984 = vmatpush1.bf16.msra.mxu0 0
        %985 = vmatprep.subr.bf16.mxu0 0
        %986 = vmatpush1.bf16.msra.mxu0 0
        %987 = vmatprep.mubr.bf16.mxu0 0
        %988 = vmatmul.mubr.bf16.gmra.mrb[0].mxu0 %v941
        %v989 = vpop.f32.mrb[0].mxu0
        %v990 = vadd.f32 0.0, %v989
        %v991 = vpop.f32.mrb[0].mxu0
        %v992 = vpop.f32.mrb[0].mxu0
        %v993 = vadd.f32 0.0, %v992
        %v994 = vpop.f32.mrb[0].mxu0
        %995 = vmatprep.mubr.bf16.mxu0 0
        %996 = vmatmul.mubr.bf16.gmra.mrb[0].mxu0 %v944
        %v997 = vpop.f32.mrb[0].mxu0
        %v998 = vadd.f32 0.0, %v997
        %v999 = vpop.f32.mrb[0].mxu0
        %v1000 = vpop.f32.mrb[0].mxu0
        %v1001 = vadd.f32 0.0, %v1000
        %v1002 = vpop.f32.mrb[0].mxu0
        %1003 = vmatprep.mubr.bf16.mxu0 0
        %1004 = vmatmul.mubr.bf16.gmra.mrb[0].mxu0 %v947
        %v1005 = vpop.f32.mrb[0].mxu0
        %v1006 = vadd.f32 0.0, %v1005
        %v1007 = vpop.f32.mrb[0].mxu0
        %v1008 = vpop.f32.mrb[0].mxu0
        %v1009 = vadd.f32 0.0, %v1008
        %v1010 = vpop.f32.mrb[0].mxu0
        %1011 = vmatprep.mubr.bf16.mxu0 0
        %1012 = vmatmul.mubr.bf16.gmra.mrb[0].mxu0 %v950
        %v1013 = vpop.f32.mrb[0].mxu0
        %v1014 = vadd.f32 0.0, %v1013
        %v1015 = vpop.f32.mrb[0].mxu0
        %v1016 = vpop.f32.mrb[0].mxu0
        %v1017 = vadd.f32 0.0, %v1016
        %v1018 = vpop.f32.mrb[0].mxu0
        %1019 = vdwg.mxu0
        %v1020 = vadd.f32 %v926, %v990
        %v1021 = vadd.f32 %v927, %v993
        %v1022 = vadd.f32 %v928, %v998
        %v1023 = vadd.f32 %v929, %v1001
        %v1024 = vadd.f32 %v930, %v1006
        %v1025 = vadd.f32 %v931, %v1009
        %v1026 = vadd.f32 %v932, %v1014
        %v1027 = vadd.f32 %v933, %v1017
        %s1028 = scalar_lea.vmem [#allocation5], 8
        %v1029 = vld [vmem:[%s1028] sm:$0x3]
        %v1030 = vunpack.c.l.b16 %v619
        %v1031 = vpack.c.b16 %v659, %v658
        %v1032 = vpack.c.b16 %v661, %v660
        %v1033 = vpack.c.b16 %v663, %v662
        %v1034 = vpack.c.b16 %v1030, %v664
        %v1036 = vsel %vm669, %v1031, 0
        %v1039 = vsel %vm669, %v1032, 0
        %v1042 = vsel %vm669, %v1033, 0
        %v1045 = vsel %vm669, %v1034, 0
        %v1048 = vsel %vm682, %v1029, 0
        %1050 = vmatprep.subr.bf16.mxu0 0
        %1051 = vmatpush1.bf16.msra.mxu0 %v1048
        %1052 = vmatprep.subr.bf16.mxu0 0
        %1053 = vmatpush1.bf16.msra.mxu0 0
        %1054 = vmatprep.subr.bf16.mxu0 0
        %1055 = vmatpush1.bf16.msra.mxu0 0
        %1056 = vmatprep.subr.bf16.mxu0 0
        %1057 = vmatpush1.bf16.msra.mxu0 0
        %1058 = vmatprep.subr.bf16.mxu0 0
        %1059 = vmatpush1.bf16.msra.mxu0 0
        %1060 = vmatprep.subr.bf16.mxu0 0
        %1061 = vmatpush1.bf16.msra.mxu0 0
        %1062 = vmatprep.subr.bf16.mxu0 0
        %1063 = vmatpush1.bf16.msra.mxu0 0
        %1064 = vmatprep.subr.bf16.mxu0 0
        %1065 = vmatpush1.bf16.msra.mxu0 0
        %1066 = vmatprep.subr.bf16.mxu0 0
        %1067 = vmatpush1.bf16.msra.mxu0 0
        %1068 = vmatprep.subr.bf16.mxu0 0
        %1069 = vmatpush1.bf16.msra.mxu0 0
        %1070 = vmatprep.subr.bf16.mxu0 0
        %1071 = vmatpush1.bf16.msra.mxu0 0
        %1072 = vmatprep.subr.bf16.mxu0 0
        %1073 = vmatpush1.bf16.msra.mxu0 0
        %1074 = vmatprep.subr.bf16.mxu0 0
        %1075 = vmatpush1.bf16.msra.mxu0 0
        %1076 = vmatprep.subr.bf16.mxu0 0
        %1077 = vmatpush1.bf16.msra.mxu0 0
        %1078 = vmatprep.subr.bf16.mxu0 0
        %1079 = vmatpush1.bf16.msra.mxu0 0
        %1080 = vmatprep.subr.bf16.mxu0 0
        %1081 = vmatpush1.bf16.msra.mxu0 0
        %1082 = vmatprep.mubr.bf16.mxu0 0
        %1083 = vmatmul.mubr.bf16.gmra.mrb[0].mxu0 %v1036
        %v1084 = vpop.f32.mrb[0].mxu0
        %v1085 = vadd.f32 0.0, %v1084
        %v1086 = vpop.f32.mrb[0].mxu0
        %v1087 = vpop.f32.mrb[0].mxu0
        %v1088 = vadd.f32 0.0, %v1087
        %v1089 = vpop.f32.mrb[0].mxu0
        %1090 = vmatprep.mubr.bf16.mxu0 0
        %1091 = vmatmul.mubr.bf16.gmra.mrb[0].mxu0 %v1039
        %v1092 = vpop.f32.mrb[0].mxu0
        %v1093 = vadd.f32 0.0, %v1092
        %v1094 = vpop.f32.mrb[0].mxu0
        %v1095 = vpop.f32.mrb[0].mxu0
        %v1096 = vadd.f32 0.0, %v1095
        %v1097 = vpop.f32.mrb[0].mxu0
        %1098 = vmatprep.mubr.bf16.mxu0 0
        %1099 = vmatmul.mubr.bf16.gmra.mrb[0].mxu0 %v1042
        %v1100 = vpop.f32.mrb[0].mxu0
        %v1101 = vadd.f32 0.0, %v1100
        %v1102 = vpop.f32.mrb[0].mxu0
        %v1103 = vpop.f32.mrb[0].mxu0
        %v1104 = vadd.f32 0.0, %v1103
        %v1105 = vpop.f32.mrb[0].mxu0
        %1106 = vmatprep.mubr.bf16.mxu0 0
        %1107 = vmatmul.mubr.bf16.gmra.mrb[0].mxu0 %v1045
        %v1108 = vpop.f32.mrb[0].mxu0
        %v1109 = vadd.f32 0.0, %v1108
        %v1110 = vpop.f32.mrb[0].mxu0
        %v1111 = vpop.f32.mrb[0].mxu0
        %v1112 = vadd.f32 0.0, %v1111
        %v1113 = vpop.f32.mrb[0].mxu0
        %1114 = vdwg.mxu0
        %v1115 = vadd.f32 %v1020, %v1085
        %v1116 = vadd.f32 %v1021, %v1088
        %v1117 = vadd.f32 %v1022, %v1093
        %v1118 = vadd.f32 %v1023, %v1096
        %v1119 = vadd.f32 %v1024, %v1101
        %v1120 = vadd.f32 %v1025, %v1104
        %v1121 = vadd.f32 %v1026, %v1109
        %v1122 = vadd.f32 %v1027, %v1112
        %s1123 = scalar_lea.vmem [#allocation5], 10
        %v1124 = vld [vmem:[%s1123] sm:$0x3]
        %v1125 = vunpack.c.l.b16 %v654
        %v1126 = vpack.c.b16 %v836, %v835
        %v1127 = vpack.c.b16 %v838, %v837
        %v1128 = vpack.c.b16 %v840, %v839
        %v1129 = vpack.c.b16 %v1125, %v841
        %v1131 = vsel %vm669, %v1126, 0
        %v1134 = vsel %vm669, %v1127, 0
        %v1137 = vsel %vm669, %v1128, 0
        %v1140 = vsel %vm669, %v1129, 0
        %v1143 = vsel %vm682, %v1124, 0
        %1145 = vmatprep.subr.bf16.mxu0 0
        %1146 = vmatpush1.bf16.msra.mxu0 %v1143
        %1147 = vmatprep.subr.bf16.mxu0 0
        %1148 = vmatpush1.bf16.msra.mxu0 0
        %1149 = vmatprep.subr.bf16.mxu0 0
        %1150 = vmatpush1.bf16.msra.mxu0 0
        %1151 = vmatprep.subr.bf16.mxu0 0
        %1152 = vmatpush1.bf16.msra.mxu0 0
        %1153 = vmatprep.subr.bf16.mxu0 0
        %1154 = vmatpush1.bf16.msra.mxu0 0
        %1155 = vmatprep.subr.bf16.mxu0 0
        %1156 = vmatpush1.bf16.msra.mxu0 0
        %1157 = vmatprep.subr.bf16.mxu0 0
        %1158 = vmatpush1.bf16.msra.mxu0 0
        %1159 = vmatprep.subr.bf16.mxu0 0
        %1160 = vmatpush1.bf16.msra.mxu0 0
        %1161 = vmatprep.subr.bf16.mxu0 0
        %1162 = vmatpush1.bf16.msra.mxu0 0
        %1163 = vmatprep.subr.bf16.mxu0 0
        %1164 = vmatpush1.bf16.msra.mxu0 0
        %1165 = vmatprep.subr.bf16.mxu0 0
        %1166 = vmatpush1.bf16.msra.mxu0 0
        %1167 = vmatprep.subr.bf16.mxu0 0
        %1168 = vmatpush1.bf16.msra.mxu0 0
        %1169 = vmatprep.subr.bf16.mxu0 0
        %1170 = vmatpush1.bf16.msra.mxu0 0
        %1171 = vmatprep.subr.bf16.mxu0 0
        %1172 = vmatpush1.bf16.msra.mxu0 0
        %1173 = vmatprep.subr.bf16.mxu0 0
        %1174 = vmatpush1.bf16.msra.mxu0 0
        %1175 = vmatprep.subr.bf16.mxu0 0
        %1176 = vmatpush1.bf16.msra.mxu0 0
        %1177 = vmatprep.mubr.bf16.mxu0 0
        %1178 = vmatmul.mubr.bf16.gmra.mrb[0].mxu0 %v1131
        %v1179 = vpop.f32.mrb[0].mxu0
        %v1180 = vadd.f32 0.0, %v1179
        %v1181 = vpop.f32.mrb[0].mxu0
        %v1182 = vpop.f32.mrb[0].mxu0
        %v1183 = vadd.f32 0.0, %v1182
        %v1184 = vpop.f32.mrb[0].mxu0
        %1185 = vmatprep.mubr.bf16.mxu0 0
        %1186 = vmatmul.mubr.bf16.gmra.mrb[0].mxu0 %v1134
        %v1187 = vpop.f32.mrb[0].mxu0
        %v1188 = vadd.f32 0.0, %v1187
        %v1189 = vpop.f32.mrb[0].mxu0
        %v1190 = vpop.f32.mrb[0].mxu0
        %v1191 = vadd.f32 0.0, %v1190
        %v1192 = vpop.f32.mrb[0].mxu0
        %1193 = vmatprep.mubr.bf16.mxu0 0
        %1194 = vmatmul.mubr.bf16.gmra.mrb[0].mxu0 %v1137
        %v1195 = vpop.f32.mrb[0].mxu0
        %v1196 = vadd.f32 0.0, %v1195
        %v1197 = vpop.f32.mrb[0].mxu0
        %v1198 = vpop.f32.mrb[0].mxu0
        %v1199 = vadd.f32 0.0, %v1198
        %v1200 = vpop.f32.mrb[0].mxu0
        %1201 = vmatprep.mubr.bf16.mxu0 0
        %1202 = vmatmul.mubr.bf16.gmra.mrb[0].mxu0 %v1140
        %v1203 = vpop.f32.mrb[0].mxu0
        %v1204 = vadd.f32 0.0, %v1203
        %v1205 = vpop.f32.mrb[0].mxu0
        %v1206 = vpop.f32.mrb[0].mxu0
        %v1207 = vadd.f32 0.0, %v1206
        %v1208 = vpop.f32.mrb[0].mxu0
        %1209 = vdwg.mxu0
        %v1210 = vadd.f32 %v1115, %v1180
        %v1211 = vadd.f32 %v1116, %v1183
        %v1212 = vadd.f32 %v1117, %v1188
        %v1213 = vadd.f32 %v1118, %v1191
        %v1214 = vadd.f32 %v1119, %v1196
        %v1215 = vadd.f32 %v1120, %v1199
        %v1216 = vadd.f32 %v1121, %v1204
        %v1217 = vadd.f32 %v1122, %v1207
        %s1218 = scalar_lea.vmem [#allocation5], 12
        %v1219 = vld [vmem:[%s1218] sm:$0x3]
        %v1220 = vsel %vm669, %v503, 0
        %v1223 = vsel %vm682, %v1219, 0
        %1225 = vmatprep.subr.bf16.mxu0 0
        %1226 = vmatpush1.bf16.msra.mxu0 %v1223
        %1227 = vmatprep.subr.bf16.mxu0 0
        %1228 = vmatpush1.bf16.msra.mxu0 0
        %1229 = vmatprep.subr.bf16.mxu0 0
        %1230 = vmatpush1.bf16.msra.mxu0 0
        %1231 = vmatprep.subr.bf16.mxu0 0
        %1232 = vmatpush1.bf16.msra.mxu0 0
        %1233 = vmatprep.subr.bf16.mxu0 0
        %1234 = vmatpush1.bf16.msra.mxu0 0
        %1235 = vmatprep.subr.bf16.mxu0 0
        %1236 = vmatpush1.bf16.msra.mxu0 0
        %1237 = vmatprep.subr.bf16.mxu0 0
        %1238 = vmatpush1.bf16.msra.mxu0 0
        %1239 = vmatprep.subr.bf16.mxu0 0
        %1240 = vmatpush1.bf16.msra.mxu0 0
        %1241 = vmatprep.subr.bf16.mxu0 0
        %1242 = vmatpush1.bf16.msra.mxu0 0
        %1243 = vmatprep.subr.bf16.mxu0 0
        %1244 = vmatpush1.bf16.msra.mxu0 0
        %1245 = vmatprep.subr.bf16.mxu0 0
        %1246 = vmatpush1.bf16.msra.mxu0 0
        %1247 = vmatprep.subr.bf16.mxu0 0
        %1248 = vmatpush1.bf16.msra.mxu0 0
        %1249 = vmatprep.subr.bf16.mxu0 0
        %1250 = vmatpush1.bf16.msra.mxu0 0
        %1251 = vmatprep.subr.bf16.mxu0 0
        %1252 = vmatpush1.bf16.msra.mxu0 0
        %1253 = vmatprep.subr.bf16.mxu0 0
        %1254 = vmatpush1.bf16.msra.mxu0 0
        %1255 = vmatprep.subr.bf16.mxu0 0
        %1256 = vmatpush1.bf16.msra.mxu0 0
        %1257 = vmatprep.mubr.bf16.mxu0 0
        %1258 = vmatmul.mubr.bf16.gmra.mrb[0].mxu0 %v757
        %v1259 = vpop.f32.mrb[0].mxu0
        %v1260 = vadd.f32 0.0, %v1259
        %v1261 = vpop.f32.mrb[0].mxu0
        %v1262 = vpop.f32.mrb[0].mxu0
        %v1263 = vadd.f32 0.0, %v1262
        %v1264 = vpop.f32.mrb[0].mxu0
        %1265 = vmatprep.mubr.bf16.mxu0 0
        %1266 = vmatmul.mubr.bf16.gmra.mrb[0].mxu0 %v760
        %v1267 = vpop.f32.mrb[0].mxu0
        %v1268 = vadd.f32 0.0, %v1267
        %v1269 = vpop.f32.mrb[0].mxu0
        %v1270 = vpop.f32.mrb[0].mxu0
        %v1271 = vadd.f32 0.0, %v1270
        %v1272 = vpop.f32.mrb[0].mxu0
        %1273 = vmatprep.mubr.bf16.mxu0 0
        %1274 = vmatmul.mubr.bf16.gmra.mrb[0].mxu0 %v763
        %v1275 = vpop.f32.mrb[0].mxu0
        %v1276 = vadd.f32 0.0, %v1275
        %v1277 = vpop.f32.mrb[0].mxu0
        %v1278 = vpop.f32.mrb[0].mxu0
        %v1279 = vadd.f32 0.0, %v1278
        %v1280 = vpop.f32.mrb[0].mxu0
        %1281 = vmatprep.mubr.bf16.mxu0 0
        %1282 = vmatmul.mubr.bf16.gmra.mrb[0].mxu0 %v1220
        %v1283 = vpop.f32.mrb[0].mxu0
        %v1284 = vadd.f32 0.0, %v1283
        %v1285 = vpop.f32.mrb[0].mxu0
        %v1286 = vpop.f32.mrb[0].mxu0
        %v1287 = vadd.f32 0.0, %v1286
        %v1288 = vpop.f32.mrb[0].mxu0
        %1289 = vdwg.mxu0
        %v1290 = vadd.f32 %v1210, %v1260
        %v1291 = vadd.f32 %v1211, %v1263
        %v1292 = vadd.f32 %v1212, %v1268
        %v1293 = vadd.f32 %v1213, %v1271
        %v1294 = vadd.f32 %v1214, %v1276
        %v1295 = vadd.f32 %v1215, %v1279
        %v1296 = vadd.f32 %v1216, %v1284
        %v1297 = vadd.f32 %v1217, %v1287
        %s1298 = scalar_lea.vmem [#allocation5], 14
        %v1299 = vld [vmem:[%s1298] sm:$0x3]
        %v1300 = vpack.c.b16 %v1030, %v1030
        %v1302 = vsel %vm669, %v1300, 0
        %v1305 = vsel %vm682, %v1299, 0
        %1307 = vmatprep.subr.bf16.mxu0 0
        %1308 = vmatpush1.bf16.msra.mxu0 %v1305
        %1309 = vmatprep.subr.bf16.mxu0 0
        %1310 = vmatpush1.bf16.msra.mxu0 0
        %1311 = vmatprep.subr.bf16.mxu0 0
        %1312 = vmatpush1.bf16.msra.mxu0 0
        %1313 = vmatprep.subr.bf16.mxu0 0
        %1314 = vmatpush1.bf16.msra.mxu0 0
        %1315 = vmatprep.subr.bf16.mxu0 0
        %1316 = vmatpush1.bf16.msra.mxu0 0
        %1317 = vmatprep.subr.bf16.mxu0 0
        %1318 = vmatpush1.bf16.msra.mxu0 0
        %1319 = vmatprep.subr.bf16.mxu0 0
        %1320 = vmatpush1.bf16.msra.mxu0 0
        %1321 = vmatprep.subr.bf16.mxu0 0
        %1322 = vmatpush1.bf16.msra.mxu0 0
        %1323 = vmatprep.subr.bf16.mxu0 0
        %1324 = vmatpush1.bf16.msra.mxu0 0
        %1325 = vmatprep.subr.bf16.mxu0 0
        %1326 = vmatpush1.bf16.msra.mxu0 0
        %1327 = vmatprep.subr.bf16.mxu0 0
        %1328 = vmatpush1.bf16.msra.mxu0 0
        %1329 = vmatprep.subr.bf16.mxu0 0
        %1330 = vmatpush1.bf16.msra.mxu0 0
        %1331 = vmatprep.subr.bf16.mxu0 0
        %1332 = vmatpush1.bf16.msra.mxu0 0
        %1333 = vmatprep.subr.bf16.mxu0 0
        %1334 = vmatpush1.bf16.msra.mxu0 0
        %1335 = vmatprep.subr.bf16.mxu0 0
        %1336 = vmatpush1.bf16.msra.mxu0 0
        %1337 = vmatprep.subr.bf16.mxu0 0
        %1338 = vmatpush1.bf16.msra.mxu0 0
        %1339 = vmatprep.mubr.bf16.mxu0 0
        %1340 = vmatmul.mubr.bf16.gmra.mrb[0].mxu0 %v674
        %v1341 = vpop.f32.mrb[0].mxu0
        %v1342 = vadd.f32 0.0, %v1341
        %v1343 = vpop.f32.mrb[0].mxu0
        %v1344 = vpop.f32.mrb[0].mxu0
        %v1345 = vadd.f32 0.0, %v1344
        %v1346 = vpop.f32.mrb[0].mxu0
        %1347 = vmatprep.mubr.bf16.mxu0 0
        %1348 = vmatmul.mubr.bf16.gmra.mrb[0].mxu0 %v677
        %v1349 = vpop.f32.mrb[0].mxu0
        %v1350 = vadd.f32 0.0, %v1349
        %v1351 = vpop.f32.mrb[0].mxu0
        %v1352 = vpop.f32.mrb[0].mxu0
        %v1353 = vadd.f32 0.0, %v1352
        %v1354 = vpop.f32.mrb[0].mxu0
        %1355 = vmatprep.mubr.bf16.mxu0 0
        %1356 = vmatmul.mubr.bf16.gmra.mrb[0].mxu0 %v680
        %v1357 = vpop.f32.mrb[0].mxu0
        %v1358 = vadd.f32 0.0, %v1357
        %v1359 = vpop.f32.mrb[0].mxu0
        %v1360 = vpop.f32.mrb[0].mxu0
        %v1361 = vadd.f32 0.0, %v1360
        %v1362 = vpop.f32.mrb[0].mxu0
        %1363 = vmatprep.mubr.bf16.mxu0 0
        %1364 = vmatmul.mubr.bf16.gmra.mrb[0].mxu0 %v1302
        %v1365 = vpop.f32.mrb[0].mxu0
        %v1366 = vadd.f32 0.0, %v1365
        %v1367 = vpop.f32.mrb[0].mxu0
        %v1368 = vpop.f32.mrb[0].mxu0
        %v1369 = vadd.f32 0.0, %v1368
        %v1370 = vpop.f32.mrb[0].mxu0
        %1371 = vdwg.mxu0
        %v1372 = vadd.f32 %v1290, %v1342
        %v1373 = vadd.f32 %v1291, %v1345
        %v1374 = vadd.f32 %v1292, %v1350
        %v1375 = vadd.f32 %v1293, %v1353
        %v1376 = vadd.f32 %v1294, %v1358
        %v1377 = vadd.f32 %v1295, %v1361
        %v1378 = vadd.f32 %v1296, %v1366
        %v1379 = vadd.f32 %v1297, %v1369
        %s1380 = scalar_lea.vmem [#allocation5], 16
        %v1381 = vld [vmem:[%s1380] sm:$0x3]
        %v1382 = vpack.c.b16 %v1125, %v1125
        %v1384 = vsel %vm669, %v1382, 0
        %v1387 = vsel %vm682, %v1381, 0
        %1389 = vmatprep.subr.bf16.mxu0 0
        %1390 = vmatpush1.bf16.msra.mxu0 %v1387
        %1391 = vmatprep.subr.bf16.mxu0 0
        %1392 = vmatpush1.bf16.msra.mxu0 0
        %1393 = vmatprep.subr.bf16.mxu0 0
        %1394 = vmatpush1.bf16.msra.mxu0 0
        %1395 = vmatprep.subr.bf16.mxu0 0
        %1396 = vmatpush1.bf16.msra.mxu0 0
        %1397 = vmatprep.subr.bf16.mxu0 0
        %1398 = vmatpush1.bf16.msra.mxu0 0
        %1399 = vmatprep.subr.bf16.mxu0 0
        %1400 = vmatpush1.bf16.msra.mxu0 0
        %1401 = vmatprep.subr.bf16.mxu0 0
        %1402 = vmatpush1.bf16.msra.mxu0 0
        %1403 = vmatprep.subr.bf16.mxu0 0
        %1404 = vmatpush1.bf16.msra.mxu0 0
        %1405 = vmatprep.subr.bf16.mxu0 0
        %1406 = vmatpush1.bf16.msra.mxu0 0
        %1407 = vmatprep.subr.bf16.mxu0 0
        %1408 = vmatpush1.bf16.msra.mxu0 0
        %1409 = vmatprep.subr.bf16.mxu0 0
        %1410 = vmatpush1.bf16.msra.mxu0 0
        %1411 = vmatprep.subr.bf16.mxu0 0
        %1412 = vmatpush1.bf16.msra.mxu0 0
        %1413 = vmatprep.subr.bf16.mxu0 0
        %1414 = vmatpush1.bf16.msra.mxu0 0
        %1415 = vmatprep.subr.bf16.mxu0 0
        %1416 = vmatpush1.bf16.msra.mxu0 0
        %1417 = vmatprep.subr.bf16.mxu0 0
        %1418 = vmatpush1.bf16.msra.mxu0 0
        %1419 = vmatprep.subr.bf16.mxu0 0
        %1420 = vmatpush1.bf16.msra.mxu0 0
        %1421 = vmatprep.mubr.bf16.mxu0 0
        %1422 = vmatmul.mubr.bf16.gmra.mrb[0].mxu0 %v850
        %v1423 = vpop.f32.mrb[0].mxu0
        %v1424 = vadd.f32 0.0, %v1423
        %v1425 = vpop.f32.mrb[0].mxu0
        %v1426 = vpop.f32.mrb[0].mxu0
        %v1427 = vadd.f32 0.0, %v1426
        %v1428 = vpop.f32.mrb[0].mxu0
        %1429 = vmatprep.mubr.bf16.mxu0 0
        %1430 = vmatmul.mubr.bf16.gmra.mrb[0].mxu0 %v853
        %v1431 = vpop.f32.mrb[0].mxu0
        %v1432 = vadd.f32 0.0, %v1431
        %v1433 = vpop.f32.mrb[0].mxu0
        %v1434 = vpop.f32.mrb[0].mxu0
        %v1435 = vadd.f32 0.0, %v1434
        %v1436 = vpop.f32.mrb[0].mxu0
        %1437 = vmatprep.mubr.bf16.mxu0 0
        %1438 = vmatmul.mubr.bf16.gmra.mrb[0].mxu0 %v856
        %v1439 = vpop.f32.mrb[0].mxu0
        %v1440 = vadd.f32 0.0, %v1439
        %v1441 = vpop.f32.mrb[0].mxu0
        %v1442 = vpop.f32.mrb[0].mxu0
        %v1443 = vadd.f32 0.0, %v1442
        %v1444 = vpop.f32.mrb[0].mxu0
        %1445 = vmatprep.mubr.bf16.mxu0 0
        %1446 = vmatmul.mubr.bf16.gmra.mrb[0].mxu0 %v1384
        %v1447 = vpop.f32.mrb[0].mxu0
        %v1448 = vadd.f32 0.0, %v1447
        %v1449 = vpop.f32.mrb[0].mxu0
        %v1450 = vpop.f32.mrb[0].mxu0
        %v1451 = vadd.f32 0.0, %v1450
        %v1452 = vpop.f32.mrb[0].mxu0
        %1453 = vdwg.mxu0
        %v1454 = vadd.f32 %v1372, %v1424
        %v1455 = vadd.f32 %v1373, %v1427
        %v1456 = vadd.f32 %v1374, %v1432
        %v1457 = vadd.f32 %v1375, %v1435
        %v1458 = vadd.f32 %v1376, %v1440
        %v1459 = vadd.f32 %v1377, %v1443
        %v1460 = vadd.f32 %v1378, %v1448
        %v1461 = vadd.f32 %v1379, %v1451
        %vm1462 = vcmask 64512
        %v1463 = vsel %vm1462, %v1454, 0.0
        %v1464 = vsel %vm1462, %v1455, 0.0
        %v1465 = vadd.f32 %v1463, %v1464
        %v1466 = vsel %vm1462, %v1456, 0.0
        %v1467 = vadd.f32 %v1465, %v1466
        %v1468 = vsel %vm1462, %v1457, 0.0
        %v1469 = vadd.f32 %v1467, %v1468
        %v1470 = vsel %vm1462, %v1458, 0.0
        %v1471 = vadd.f32 %v1469, %v1470
        %v1472 = vsel %vm1462, %v1459, 0.0
        %v1473 = vadd.f32 %v1471, %v1472
        %v1474 = vsel %vm1462, %v1460, 0.0
        %v1475 = vadd.f32 %v1473, %v1474
        %v1476 = vsel %vm1462, %v1461, 0.0
        %v1477 = vadd.f32 %v1475, %v1476
        %v1478 = vrot.slane %v1477, 4
        %v1479 = vadd.f32 %v1477, %v1478
        %v1480 = vrot.slane %v1479, 2
        %v1481 = vadd.f32 %v1479, %v1480
        %v1482 = vrot.slane %v1481, 1
        %v1483 = vadd.f32 %v1481, %v1482
        %v1484 = vmul.f32 %v1483, 0.015625
        %v1485 = vsub.f32 %v1454, %v1484
        %v1486 = vsub.f32 %v1455, %v1484
        %v1487 = vsub.f32 %v1456, %v1484
        %v1488 = vsub.f32 %v1457, %v1484
        %v1489 = vsub.f32 %v1458, %v1484
        %v1490 = vsub.f32 %v1459, %v1484
        %v1491 = vsub.f32 %v1460, %v1484
        %v1492 = vsub.f32 %v1461, %v1484
        %v1493 = vmul.f32 %v1485, %v1485
        %v1494 = vmul.f32 %v1486, %v1486
        %v1495 = vmul.f32 %v1487, %v1487
        %v1496 = vmul.f32 %v1488, %v1488
        %v1497 = vmul.f32 %v1489, %v1489
        %v1498 = vmul.f32 %v1490, %v1490
        %v1499 = vmul.f32 %v1491, %v1491
        %v1500 = vmul.f32 %v1492, %v1492
        %v1501 = vsel %vm1462, %v1493, 0.0
        %v1502 = vsel %vm1462, %v1494, 0.0
        %v1503 = vadd.f32 %v1501, %v1502
        %v1504 = vsel %vm1462, %v1495, 0.0
        %v1505 = vadd.f32 %v1503, %v1504
        %v1506 = vsel %vm1462, %v1496, 0.0
        %v1507 = vadd.f32 %v1505, %v1506
        %v1508 = vsel %vm1462, %v1497, 0.0
        %v1509 = vadd.f32 %v1507, %v1508
        %v1510 = vsel %vm1462, %v1498, 0.0
        %v1511 = vadd.f32 %v1509, %v1510
        %v1512 = vsel %vm1462, %v1499, 0.0
        %v1513 = vadd.f32 %v1511, %v1512
        %v1514 = vsel %vm1462, %v1500, 0.0
        %v1515 = vadd.f32 %v1513, %v1514
        %v1516 = vrot.slane %v1515, 4
        %v1517 = vadd.f32 %v1515, %v1516
        %v1518 = vrot.slane %v1517, 2
        %v1519 = vadd.f32 %v1517, %v1518
        %v1520 = vrot.slane %v1519, 1
        %v1521 = vadd.f32 %v1519, %v1520
        %v1522 = vmul.f32 %v1521, 0.015625
        %v1523 = vadd.f32 %v1522, 1e-05
        %v1524 = vrsqrt.pop %v1523
        %v1525 = vmul.f32 %v1485, %v1524
        %v1526 = vmul.f32 %v1486, %v1524
        %v1527 = vmul.f32 %v1487, %v1524
        %v1528 = vmul.f32 %v1488, %v1524
        %v1529 = vmul.f32 %v1489, %v1524
        %v1530 = vmul.f32 %v1490, %v1524
        %v1531 = vmul.f32 %v1491, %v1524
        %v1532 = vmul.f32 %v1492, %v1524
        %v1533 = vmax.f32 %v1525, 0.0
        %v1534 = vmax.f32 %v1526, 0.0
        %v1535 = vmax.f32 %v1527, 0.0
        %v1536 = vmax.f32 %v1528, 0.0
        %v1537 = vmax.f32 %v1529, 0.0
        %v1538 = vmax.f32 %v1530, 0.0
        %v1539 = vmax.f32 %v1531, 0.0
        %v1540 = vmax.f32 %v1532, 0.0
        %v1541 = vpack.c.bf16 %v1533, %v1533
        %v1542 = vpack.c.bf16 %v1534, %v1534
        %v1543 = vpack.c.bf16 %v1535, %v1535
        %v1544 = vpack.c.bf16 %v1536, %v1536
        %v1545 = vpack.c.bf16 %v1537, %v1537
        %v1546 = vpack.c.bf16 %v1538, %v1538
        %v1547 = vpack.c.bf16 %v1539, %v1539
        %v1548 = vpack.c.bf16 %v1540, %v1540
        %v1550 = vshrl.u32 %v1541, 16
        %v1552 = vrot.slane %v1550, 3
        %v1554 = vshrl.u32 %v1542, 16
        %v1556 = vrot.slane %v1554, 3
        %v1558 = vshrl.u32 %v1543, 16
        %v1560 = vrot.slane %v1558, 3
        %v1562 = vshrl.u32 %v1544, 16
        %v1564 = vrot.slane %v1562, 3
        %v1566 = vshrl.u32 %v1545, 16
        %v1568 = vrot.slane %v1566, 3
        %v1570 = vshrl.u32 %v1546, 16
        %v1572 = vrot.slane %v1570, 3
        %v1574 = vshrl.u32 %v1547, 16
        %v1576 = vrot.slane %v1574, 3
        %v1578 = vshrl.u32 %v1548, 16
        %v1580 = vrot.slane %v1578, 3
        %v1589 = vrot.slane %v1550, 7
        %v1590 = vshll.u32 %v1541, 16
        %v1592 = vor.u32 %v1589, %v1590
        %v1593 = vrot.slane %v1554, 7
        %v1594 = vshll.u32 %v1542, 16
        %v1596 = vor.u32 %v1593, %v1594
        %v1597 = vrot.slane %v1558, 7
        %v1598 = vshll.u32 %v1543, 16
        %v1600 = vor.u32 %v1597, %v1598
        %v1601 = vrot.slane %v1562, 7
        %v1602 = vshll.u32 %v1544, 16
        %v1604 = vor.u32 %v1601, %v1602
        %v1605 = vrot.slane %v1566, 7
        %v1606 = vshll.u32 %v1545, 16
        %v1608 = vor.u32 %v1605, %v1606
        %v1609 = vrot.slane %v1570, 7
        %v1610 = vshll.u32 %v1546, 16
        %v1612 = vor.u32 %v1609, %v1610
        %v1613 = vrot.slane %v1574, 7
        %v1614 = vshll.u32 %v1547, 16
        %v1616 = vor.u32 %v1613, %v1614
        %v1617 = vrot.slane %v1578, 7
        %v1618 = vshll.u32 %v1548, 16
        %v1620 = vor.u32 %v1617, %v1618
        %v1629 = vrot.slane %v1590, 4
        %v1630 = vrot.slane %v1594, 4
        %v1631 = vrot.slane %v1598, 4
        %v1632 = vrot.slane %v1602, 4
        %v1633 = vrot.slane %v1606, 4
        %v1634 = vrot.slane %v1610, 4
        %v1635 = vrot.slane %v1614, 4
        %v1636 = vrot.slane %v1618, 4
        %v1645 = vsel %vm445, %v1552, %v1592
        %v1646 = vsel %vm445, %v1556, %v1596
        %v1647 = vsel %vm445, %v1560, %v1600
        %v1648 = vsel %vm445, %v1564, %v1604
        %v1649 = vsel %vm445, %v1568, %v1608
        %v1650 = vsel %vm445, %v1572, %v1612
        %v1651 = vsel %vm445, %v1576, %v1616
        %v1652 = vsel %vm445, %v1580, %v1620
        %v1653 = vsel %vm456, %v1645, %v1629
        %v1654 = vsel %vm456, %v1646, %v1630
        %v1655 = vsel %vm456, %v1647, %v1631
        %v1656 = vsel %vm456, %v1648, %v1632
        %v1657 = vsel %vm456, %v1649, %v1633
        %v1658 = vsel %vm456, %v1650, %v1634
        %v1659 = vsel %vm456, %v1651, %v1635
        %v1660 = vsel %vm456, %v1652, %v1636
        %v1669 = vunpack.c.l.b16 %v1653
        %v1670 = vunpack.c.h.b16 %v1653
        %v1671 = vunpack.c.l.b16 %v1654
        %v1672 = vunpack.c.h.b16 %v1654
        %v1673 = vunpack.c.l.b16 %v1655
        %v1674 = vunpack.c.h.b16 %v1655
        %v1675 = vunpack.c.l.b16 %v1656
        %v1676 = vunpack.c.h.b16 %v1656
        %v1677 = vunpack.c.l.b16 %v1657
        %v1678 = vunpack.c.h.b16 %v1657
        %v1679 = vunpack.c.l.b16 %v1658
        %v1680 = vunpack.c.h.b16 %v1658
        %v1681 = vunpack.c.l.b16 %v1659
        %v1682 = vunpack.c.h.b16 %v1659
        %v1683 = vunpack.c.l.b16 %v1660
        %v1684 = vunpack.c.h.b16 %v1660
        %v1685 = vpack.c.b16 %v1669, %v1669
        %v1686 = vpack.c.b16 %v1670, %v1670
        %v1687 = vpack.c.b16 %v1671, %v1671
        %v1688 = vpack.c.b16 %v1672, %v1672
        %v1689 = vpack.c.b16 %v1673, %v1673
        %v1690 = vpack.c.b16 %v1674, %v1674
        %v1691 = vpack.c.b16 %v1675, %v1675
        %v1692 = vpack.c.b16 %v1676, %v1676
        %v1693 = vpack.c.b16 %v1677, %v1677
        %v1694 = vpack.c.b16 %v1678, %v1678
        %v1695 = vpack.c.b16 %v1679, %v1679
        %v1696 = vpack.c.b16 %v1680, %v1680
        %v1697 = vpack.c.b16 %v1681, %v1681
        %v1698 = vpack.c.b16 %v1682, %v1682
        %v1699 = vpack.c.b16 %v1683, %v1683
        %v1700 = vpack.c.b16 %v1684, %v1684
        %v1702 = vshrl.u32 %v1685, 16
        %v1704 = vrot.slane %v1702, 4
        %v1705 = vshll.u32 %v1685, 16
        %v1707 = vrot.slane %v1705, 5
        %v1708 = vor.u32 %v1704, %v1707
        %v1709 = vrot.slane %v1708, 4
        %v1711 = vshll.u32 %v1686, 16
        %v1713 = vrot.slane %v1711, 5
        %v1714 = vsel %vm507, %v1709, %v1713
        %v1716 = vshrl.u32 %v1687, 16
        %v1718 = vrot.slane %v1716, 4
        %v1719 = vshll.u32 %v1687, 16
        %v1721 = vrot.slane %v1719, 5
        %v1722 = vor.u32 %v1718, %v1721
        %v1723 = vrot.slane %v1722, 4
        %v1725 = vshll.u32 %v1688, 16
        %v1727 = vrot.slane %v1725, 5
        %v1728 = vsel %vm507, %v1723, %v1727
        %v1730 = vshrl.u32 %v1689, 16
        %v1732 = vrot.slane %v1730, 4
        %v1733 = vshll.u32 %v1689, 16
        %v1735 = vrot.slane %v1733, 5
        %v1736 = vor.u32 %v1732, %v1735
        %v1737 = vrot.slane %v1736, 4
        %v1739 = vshll.u32 %v1690, 16
        %v1741 = vrot.slane %v1739, 5
        %v1742 = vsel %vm507, %v1737, %v1741
        %v1744 = vshrl.u32 %v1691, 16
        %v1746 = vrot.slane %v1744, 4
        %v1747 = vshll.u32 %v1691, 16
        %v1749 = vrot.slane %v1747, 5
        %v1750 = vor.u32 %v1746, %v1749
        %v1751 = vrot.slane %v1750, 4
        %v1753 = vshll.u32 %v1692, 16
        %v1755 = vrot.slane %v1753, 5
        %v1756 = vsel %vm507, %v1751, %v1755
        %v1758 = vshrl.u32 %v1693, 16
        %v1760 = vrot.slane %v1758, 4
        %v1761 = vshll.u32 %v1693, 16
        %v1763 = vrot.slane %v1761, 5
        %v1764 = vor.u32 %v1760, %v1763
        %v1765 = vrot.slane %v1764, 4
        %v1767 = vshll.u32 %v1694, 16
        %v1769 = vrot.slane %v1767, 5
        %v1770 = vsel %vm507, %v1765, %v1769
        %v1772 = vshrl.u32 %v1695, 16
        %v1774 = vrot.slane %v1772, 4
        %v1775 = vshll.u32 %v1695, 16
        %v1777 = vrot.slane %v1775, 5
        %v1778 = vor.u32 %v1774, %v1777
        %v1779 = vrot.slane %v1778, 4
        %v1781 = vshll.u32 %v1696, 16
        %v1783 = vrot.slane %v1781, 5
        %v1784 = vsel %vm507, %v1779, %v1783
        %v1786 = vshrl.u32 %v1697, 16
        %v1788 = vrot.slane %v1786, 4
        %v1789 = vshll.u32 %v1697, 16
        %v1791 = vrot.slane %v1789, 5
        %v1792 = vor.u32 %v1788, %v1791
        %v1793 = vrot.slane %v1792, 4
        %v1795 = vshll.u32 %v1698, 16
        %v1797 = vrot.slane %v1795, 5
        %v1798 = vsel %vm507, %v1793, %v1797
        %v1800 = vshrl.u32 %v1699, 16
        %v1802 = vrot.slane %v1800, 4
        %v1803 = vshll.u32 %v1699, 16
        %v1805 = vrot.slane %v1803, 5
        %v1806 = vor.u32 %v1802, %v1805
        %v1807 = vrot.slane %v1806, 4
        %v1809 = vshll.u32 %v1700, 16
        %v1811 = vrot.slane %v1809, 5
        %v1812 = vsel %vm507, %v1807, %v1811
        %v1813 = vrot.slane %v1685, 5
        %v1814 = vrot.slane %v1813, 4
        %v1815 = vrot.slane %v1686, 5
        %v1816 = vsel %vm622, %v1814, %v1815
        %v1817 = vrot.slane %v1687, 5
        %v1818 = vrot.slane %v1817, 4
        %v1819 = vrot.slane %v1688, 5
        %v1820 = vsel %vm622, %v1818, %v1819
        %v1821 = vrot.slane %v1689, 5
        %v1822 = vrot.slane %v1821, 4
        %v1823 = vrot.slane %v1690, 5
        %v1824 = vsel %vm622, %v1822, %v1823
        %v1825 = vrot.slane %v1691, 5
        %v1826 = vrot.slane %v1825, 4
        %v1827 = vrot.slane %v1692, 5
        %v1828 = vsel %vm622, %v1826, %v1827
        %v1829 = vrot.slane %v1693, 5
        %v1830 = vrot.slane %v1829, 4
        %v1831 = vrot.slane %v1694, 5
        %v1832 = vsel %vm622, %v1830, %v1831
        %v1833 = vrot.slane %v1695, 5
        %v1834 = vrot.slane %v1833, 4
        %v1835 = vrot.slane %v1696, 5
        %v1836 = vsel %vm622, %v1834, %v1835
        %v1837 = vrot.slane %v1697, 5
        %v1838 = vrot.slane %v1837, 4
        %v1839 = vrot.slane %v1698, 5
        %v1840 = vsel %vm622, %v1838, %v1839
        %v1841 = vrot.slane %v1699, 5
        %v1842 = vrot.slane %v1841, 4
        %v1843 = vrot.slane %v1700, 5
        %v1844 = vsel %vm622, %v1842, %v1843
        %v1845 = vld [vmem:[#allocation7] sm:$0xf]
        %s1846 = scalar_lea.vmem [#allocation7], 4
        %v1847 = vld [vmem:[%s1846] sm:$0xf]
        %v1848 = vunpack.c.l.b16 %v1714
        %v1849 = vunpack.c.l.b16 %v1728
        %v1850 = vunpack.c.l.b16 %v1742
        %v1851 = vunpack.c.l.b16 %v1756
        %v1852 = vunpack.c.l.b16 %v1770
        %v1853 = vunpack.c.l.b16 %v1784
        %v1854 = vunpack.c.l.b16 %v1798
        %v1855 = vpack.c.b16 %v1848, %v1848
        %v1856 = vpack.c.b16 %v1850, %v1849
        %v1857 = vpack.c.b16 %v1852, %v1851
        %v1858 = vpack.c.b16 %v1854, %v1853
        %v1860 = vsel %vm1462, %v1855, 0
        %v1863 = vsel %vm1462, %v1856, 0
        %v1866 = vsel %vm1462, %v1857, 0
        %v1869 = vsel %vm1462, %v1858, 0
        %vm1871 = vcmask 1043456
        %v1873 = vsel %vm1871, %v1847, 0
        %1875 = vmatprep.subr.bf16.mxu0 0
        %1876 = vmatpush1.bf16.msra.mxu0 %v1873
        %1877 = vmatprep.subr.bf16.mxu0 0
        %1878 = vmatpush1.bf16.msra.mxu0 0
        %1879 = vmatprep.subr.bf16.mxu0 0
        %1880 = vmatpush1.bf16.msra.mxu0 0
        %1881 = vmatprep.subr.bf16.mxu0 0
        %1882 = vmatpush1.bf16.msra.mxu0 0
        %1883 = vmatprep.subr.bf16.mxu0 0
        %1884 = vmatpush1.bf16.msra.mxu0 0
        %1885 = vmatprep.subr.bf16.mxu0 0
        %1886 = vmatpush1.bf16.msra.mxu0 0
        %1887 = vmatprep.subr.bf16.mxu0 0
        %1888 = vmatpush1.bf16.msra.mxu0 0
        %1889 = vmatprep.subr.bf16.mxu0 0
        %1890 = vmatpush1.bf16.msra.mxu0 0
        %1891 = vmatprep.subr.bf16.mxu0 0
        %1892 = vmatpush1.bf16.msra.mxu0 0
        %1893 = vmatprep.subr.bf16.mxu0 0
        %1894 = vmatpush1.bf16.msra.mxu0 0
        %1895 = vmatprep.subr.bf16.mxu0 0
        %1896 = vmatpush1.bf16.msra.mxu0 0
        %1897 = vmatprep.subr.bf16.mxu0 0
        %1898 = vmatpush1.bf16.msra.mxu0 0
        %1899 = vmatprep.subr.bf16.mxu0 0
        %1900 = vmatpush1.bf16.msra.mxu0 0
        %1901 = vmatprep.subr.bf16.mxu0 0
        %1902 = vmatpush1.bf16.msra.mxu0 0
        %1903 = vmatprep.subr.bf16.mxu0 0
        %1904 = vmatpush1.bf16.msra.mxu0 0
        %1905 = vmatprep.subr.bf16.mxu0 0
        %1906 = vmatpush1.bf16.msra.mxu0 0
        %1907 = vmatprep.mubr.bf16.mxu0 0
        %1908 = vmatmul.mubr.bf16.gmra.mrb[0].mxu0 %v1860
        %v1909 = vpop.f32.mrb[0].mxu0
        %v1910 = vadd.f32 0.0, %v1909
        %v1911 = vpop.f32.mrb[0].mxu0
        %v1912 = vpop.f32.mrb[0].mxu0
        %v1913 = vadd.f32 0.0, %v1912
        %v1914 = vpop.f32.mrb[0].mxu0
        %1915 = vmatprep.mubr.bf16.mxu0 0
        %1916 = vmatmul.mubr.bf16.gmra.mrb[0].mxu0 %v1863
        %v1917 = vpop.f32.mrb[0].mxu0
        %v1918 = vadd.f32 0.0, %v1917
        %v1919 = vpop.f32.mrb[0].mxu0
        %v1920 = vpop.f32.mrb[0].mxu0
        %v1921 = vadd.f32 0.0, %v1920
        %v1922 = vpop.f32.mrb[0].mxu0
        %1923 = vmatprep.mubr.bf16.mxu0 0
        %1924 = vmatmul.mubr.bf16.gmra.mrb[0].mxu0 %v1866
        %v1925 = vpop.f32.mrb[0].mxu0
        %v1926 = vadd.f32 0.0, %v1925
        %v1927 = vpop.f32.mrb[0].mxu0
        %v1928 = vpop.f32.mrb[0].mxu0
        %v1929 = vadd.f32 0.0, %v1928
        %v1930 = vpop.f32.mrb[0].mxu0
        %1931 = vmatprep.mubr.bf16.mxu0 0
        %1932 = vmatmul.mubr.bf16.gmra.mrb[0].mxu0 %v1869
        %v1933 = vpop.f32.mrb[0].mxu0
        %v1934 = vadd.f32 0.0, %v1933
        %v1935 = vpop.f32.mrb[0].mxu0
        %v1936 = vpop.f32.mrb[0].mxu0
        %v1937 = vadd.f32 0.0, %v1936
        %v1938 = vpop.f32.mrb[0].mxu0
        %1939 = vdwg.mxu0
        %v1940 = vpack.c.b16 %v1673, %v1671
        %v1941 = vpack.c.b16 %v1677, %v1675
        %v1942 = vpack.c.b16 %v1681, %v1679
        %v1943 = vsel %vm1462, %v1685, 0
        %v1946 = vsel %vm1462, %v1940, 0
        %v1949 = vsel %vm1462, %v1941, 0
        %v1952 = vsel %vm1462, %v1942, 0
        %v1955 = vsel %vm1871, %v1845, 0
        %1957 = vmatprep.subr.bf16.mxu0 0
        %1958 = vmatpush1.bf16.msra.mxu0 %v1955
        %1959 = vmatprep.subr.bf16.mxu0 0
        %1960 = vmatpush1.bf16.msra.mxu0 0
        %1961 = vmatprep.subr.bf16.mxu0 0
        %1962 = vmatpush1.bf16.msra.mxu0 0
        %1963 = vmatprep.subr.bf16.mxu0 0
        %1964 = vmatpush1.bf16.msra.mxu0 0
        %1965 = vmatprep.subr.bf16.mxu0 0
        %1966 = vmatpush1.bf16.msra.mxu0 0
        %1967 = vmatprep.subr.bf16.mxu0 0
        %1968 = vmatpush1.bf16.msra.mxu0 0
        %1969 = vmatprep.subr.bf16.mxu0 0
        %1970 = vmatpush1.bf16.msra.mxu0 0
        %1971 = vmatprep.subr.bf16.mxu0 0
        %1972 = vmatpush1.bf16.msra.mxu0 0
        %1973 = vmatprep.subr.bf16.mxu0 0
        %1974 = vmatpush1.bf16.msra.mxu0 0
        %1975 = vmatprep.subr.bf16.mxu0 0
        %1976 = vmatpush1.bf16.msra.mxu0 0
        %1977 = vmatprep.subr.bf16.mxu0 0
        %1978 = vmatpush1.bf16.msra.mxu0 0
        %1979 = vmatprep.subr.bf16.mxu0 0
        %1980 = vmatpush1.bf16.msra.mxu0 0
        %1981 = vmatprep.subr.bf16.mxu0 0
        %1982 = vmatpush1.bf16.msra.mxu0 0
        %1983 = vmatprep.subr.bf16.mxu0 0
        %1984 = vmatpush1.bf16.msra.mxu0 0
        %1985 = vmatprep.subr.bf16.mxu0 0
        %1986 = vmatpush1.bf16.msra.mxu0 0
        %1987 = vmatprep.subr.bf16.mxu0 0
        %1988 = vmatpush1.bf16.msra.mxu0 0
        %1989 = vmatprep.mubr.bf16.mxu0 0
        %1990 = vmatmul.mubr.bf16.gmra.mrb[0].mxu0 %v1943
        %v1991 = vpop.f32.mrb[0].mxu0
        %v1992 = vadd.f32 %v1910, %v1991
        %v1993 = vpop.f32.mrb[0].mxu0
        %v1994 = vpop.f32.mrb[0].mxu0
        %v1995 = vadd.f32 %v1913, %v1994
        %v1996 = vpop.f32.mrb[0].mxu0
        %1997 = vmatprep.mubr.bf16.mxu0 0
        %1998 = vmatmul.mubr.bf16.gmra.mrb[0].mxu0 %v1946
        %v1999 = vpop.f32.mrb[0].mxu0
        %v2000 = vadd.f32 %v1918, %v1999
        %v2001 = vpop.f32.mrb[0].mxu0
        %v2002 = vpop.f32.mrb[0].mxu0
        %v2003 = vadd.f32 %v1921, %v2002
        %v2004 = vpop.f32.mrb[0].mxu0
        %2005 = vmatprep.mubr.bf16.mxu0 0
        %2006 = vmatmul.mubr.bf16.gmra.mrb[0].mxu0 %v1949
        %v2007 = vpop.f32.mrb[0].mxu0
        %v2008 = vadd.f32 %v1926, %v2007
        %v2009 = vpop.f32.mrb[0].mxu0
        %v2010 = vpop.f32.mrb[0].mxu0
        %v2011 = vadd.f32 %v1929, %v2010
        %v2012 = vpop.f32.mrb[0].mxu0
        %2013 = vmatprep.mubr.bf16.mxu0 0
        %2014 = vmatmul.mubr.bf16.gmra.mrb[0].mxu0 %v1952
        %v2015 = vpop.f32.mrb[0].mxu0
        %v2016 = vadd.f32 %v1934, %v2015
        %v2017 = vpop.f32.mrb[0].mxu0
        %v2018 = vpop.f32.mrb[0].mxu0
        %v2019 = vadd.f32 %v1937, %v2018
        %v2020 = vpop.f32.mrb[0].mxu0
        %2021 = vdwg.mxu0
        %s2022 = scalar_lea.vmem [#allocation7], 8
        %v2023 = vld [vmem:[%s2022] sm:$0xf]
        %v2024 = vunpack.c.l.b16 %v1816
        %v2025 = vunpack.c.l.b16 %v1820
        %v2026 = vunpack.c.l.b16 %v1824
        %v2027 = vunpack.c.l.b16 %v1828
        %v2028 = vunpack.c.l.b16 %v1832
        %v2029 = vunpack.c.l.b16 %v1836
        %v2030 = vunpack.c.l.b16 %v1840
        %v2031 = vpack.c.b16 %v2024, %v2024
        %v2032 = vpack.c.b16 %v2026, %v2025
        %v2033 = vpack.c.b16 %v2028, %v2027
        %v2034 = vpack.c.b16 %v2030, %v2029
        %v2036 = vsel %vm1462, %v2031, 0
        %v2039 = vsel %vm1462, %v2032, 0
        %v2042 = vsel %vm1462, %v2033, 0
        %v2045 = vsel %vm1462, %v2034, 0
        %v2048 = vsel %vm1871, %v2023, 0
        %2050 = vmatprep.subr.bf16.mxu0 0
        %2051 = vmatpush1.bf16.msra.mxu0 %v2048
        %2052 = vmatprep.subr.bf16.mxu0 0
        %2053 = vmatpush1.bf16.msra.mxu0 0
        %2054 = vmatprep.subr.bf16.mxu0 0
        %2055 = vmatpush1.bf16.msra.mxu0 0
        %2056 = vmatprep.subr.bf16.mxu0 0
        %2057 = vmatpush1.bf16.msra.mxu0 0
        %2058 = vmatprep.subr.bf16.mxu0 0
        %2059 = vmatpush1.bf16.msra.mxu0 0
        %2060 = vmatprep.subr.bf16.mxu0 0
        %2061 = vmatpush1.bf16.msra.mxu0 0
        %2062 = vmatprep.subr.bf16.mxu0 0
        %2063 = vmatpush1.bf16.msra.mxu0 0
        %2064 = vmatprep.subr.bf16.mxu0 0
        %2065 = vmatpush1.bf16.msra.mxu0 0
        %2066 = vmatprep.subr.bf16.mxu0 0
        %2067 = vmatpush1.bf16.msra.mxu0 0
        %2068 = vmatprep.subr.bf16.mxu0 0
        %2069 = vmatpush1.bf16.msra.mxu0 0
        %2070 = vmatprep.subr.bf16.mxu0 0
        %2071 = vmatpush1.bf16.msra.mxu0 0
        %2072 = vmatprep.subr.bf16.mxu0 0
        %2073 = vmatpush1.bf16.msra.mxu0 0
        %2074 = vmatprep.subr.bf16.mxu0 0
        %2075 = vmatpush1.bf16.msra.mxu0 0
        %2076 = vmatprep.subr.bf16.mxu0 0
        %2077 = vmatpush1.bf16.msra.mxu0 0
        %2078 = vmatprep.subr.bf16.mxu0 0
        %2079 = vmatpush1.bf16.msra.mxu0 0
        %2080 = vmatprep.subr.bf16.mxu0 0
        %2081 = vmatpush1.bf16.msra.mxu0 0
        %2082 = vmatprep.mubr.bf16.mxu0 0
        %2083 = vmatmul.mubr.bf16.gmra.mrb[0].mxu0 %v2036
        %v2084 = vpop.f32.mrb[0].mxu0
        %v2085 = vadd.f32 0.0, %v2084
        %v2086 = vpop.f32.mrb[0].mxu0
        %v2087 = vpop.f32.mrb[0].mxu0
        %v2088 = vadd.f32 0.0, %v2087
        %v2089 = vpop.f32.mrb[0].mxu0
        %2090 = vmatprep.mubr.bf16.mxu0 0
        %2091 = vmatmul.mubr.bf16.gmra.mrb[0].mxu0 %v2039
        %v2092 = vpop.f32.mrb[0].mxu0
        %v2093 = vadd.f32 0.0, %v2092
        %v2094 = vpop.f32.mrb[0].mxu0
        %v2095 = vpop.f32.mrb[0].mxu0
        %v2096 = vadd.f32 0.0, %v2095
        %v2097 = vpop.f32.mrb[0].mxu0
        %2098 = vmatprep.mubr.bf16.mxu0 0
        %2099 = vmatmul.mubr.bf16.gmra.mrb[0].mxu0 %v2042
        %v2100 = vpop.f32.mrb[0].mxu0
        %v2101 = vadd.f32 0.0, %v2100
        %v2102 = vpop.f32.mrb[0].mxu0
        %v2103 = vpop.f32.mrb[0].mxu0
        %v2104 = vadd.f32 0.0, %v2103
        %v2105 = vpop.f32.mrb[0].mxu0
        %2106 = vmatprep.mubr.bf16.mxu0 0
        %2107 = vmatmul.mubr.bf16.gmra.mrb[0].mxu0 %v2045
        %v2108 = vpop.f32.mrb[0].mxu0
        %v2109 = vadd.f32 0.0, %v2108
        %v2110 = vpop.f32.mrb[0].mxu0
        %v2111 = vpop.f32.mrb[0].mxu0
        %v2112 = vadd.f32 0.0, %v2111
        %v2113 = vpop.f32.mrb[0].mxu0
        %2114 = vdwg.mxu0
        %v2115 = vadd.f32 %v1992, %v2085
        %v2116 = vadd.f32 %v1995, %v2088
        %v2117 = vadd.f32 %v2000, %v2093
        %v2118 = vadd.f32 %v2003, %v2096
        %v2119 = vadd.f32 %v2008, %v2101
        %v2120 = vadd.f32 %v2011, %v2104
        %v2121 = vadd.f32 %v2016, %v2109
        %v2122 = vadd.f32 %v2019, %v2112
        %s2123 = scalar_lea.vmem [#allocation7], 12
        %v2124 = vld [vmem:[%s2123] sm:$0xf]
        %v2125 = vpack.c.b16 %v1671, %v1669
        %v2126 = vpack.c.b16 %v1675, %v1673
        %v2127 = vpack.c.b16 %v1679, %v1677
        %v2128 = vpack.c.b16 %v1683, %v1681
        %v2130 = vsel %vm1462, %v2125, 0
        %v2133 = vsel %vm1462, %v2126, 0
        %v2136 = vsel %vm1462, %v2127, 0
        %v2139 = vsel %vm1462, %v2128, 0
        %v2142 = vsel %vm1871, %v2124, 0
        %2144 = vmatprep.subr.bf16.mxu0 0
        %2145 = vmatpush1.bf16.msra.mxu0 %v2142
        %2146 = vmatprep.subr.bf16.mxu0 0
        %2147 = vmatpush1.bf16.msra.mxu0 0
        %2148 = vmatprep.subr.bf16.mxu0 0
        %2149 = vmatpush1.bf16.msra.mxu0 0
        %2150 = vmatprep.subr.bf16.mxu0 0
        %2151 = vmatpush1.bf16.msra.mxu0 0
        %2152 = vmatprep.subr.bf16.mxu0 0
        %2153 = vmatpush1.bf16.msra.mxu0 0
        %2154 = vmatprep.subr.bf16.mxu0 0
        %2155 = vmatpush1.bf16.msra.mxu0 0
        %2156 = vmatprep.subr.bf16.mxu0 0
        %2157 = vmatpush1.bf16.msra.mxu0 0
        %2158 = vmatprep.subr.bf16.mxu0 0
        %2159 = vmatpush1.bf16.msra.mxu0 0
        %2160 = vmatprep.subr.bf16.mxu0 0
        %2161 = vmatpush1.bf16.msra.mxu0 0
        %2162 = vmatprep.subr.bf16.mxu0 0
        %2163 = vmatpush1.bf16.msra.mxu0 0
        %2164 = vmatprep.subr.bf16.mxu0 0
        %2165 = vmatpush1.bf16.msra.mxu0 0
        %2166 = vmatprep.subr.bf16.mxu0 0
        %2167 = vmatpush1.bf16.msra.mxu0 0
        %2168 = vmatprep.subr.bf16.mxu0 0
        %2169 = vmatpush1.bf16.msra.mxu0 0
        %2170 = vmatprep.subr.bf16.mxu0 0
        %2171 = vmatpush1.bf16.msra.mxu0 0
        %2172 = vmatprep.subr.bf16.mxu0 0
        %2173 = vmatpush1.bf16.msra.mxu0 0
        %2174 = vmatprep.subr.bf16.mxu0 0
        %2175 = vmatpush1.bf16.msra.mxu0 0
        %2176 = vmatprep.mubr.bf16.mxu0 0
        %2177 = vmatmul.mubr.bf16.gmra.mrb[0].mxu0 %v2130
        %v2178 = vpop.f32.mrb[0].mxu0
        %v2179 = vadd.f32 0.0, %v2178
        %v2180 = vpop.f32.mrb[0].mxu0
        %v2181 = vpop.f32.mrb[0].mxu0
        %v2182 = vadd.f32 0.0, %v2181
        %v2183 = vpop.f32.mrb[0].mxu0
        %2184 = vmatprep.mubr.bf16.mxu0 0
        %2185 = vmatmul.mubr.bf16.gmra.mrb[0].mxu0 %v2133
        %v2186 = vpop.f32.mrb[0].mxu0
        %v2187 = vadd.f32 0.0, %v2186
        %v2188 = vpop.f32.mrb[0].mxu0
        %v2189 = vpop.f32.mrb[0].mxu0
        %v2190 = vadd.f32 0.0, %v2189
        %v2191 = vpop.f32.mrb[0].mxu0
        %2192 = vmatprep.mubr.bf16.mxu0 0
        %2193 = vmatmul.mubr.bf16.gmra.mrb[0].mxu0 %v2136
        %v2194 = vpop.f32.mrb[0].mxu0
        %v2195 = vadd.f32 0.0, %v2194
        %v2196 = vpop.f32.mrb[0].mxu0
        %v2197 = vpop.f32.mrb[0].mxu0
        %v2198 = vadd.f32 0.0, %v2197
        %v2199 = vpop.f32.mrb[0].mxu0
        %2200 = vmatprep.mubr.bf16.mxu0 0
        %2201 = vmatmul.mubr.bf16.gmra.mrb[0].mxu0 %v2139
        %v2202 = vpop.f32.mrb[0].mxu0
        %v2203 = vadd.f32 0.0, %v2202
        %v2204 = vpop.f32.mrb[0].mxu0
        %v2205 = vpop.f32.mrb[0].mxu0
        %v2206 = vadd.f32 0.0, %v2205
        %v2207 = vpop.f32.mrb[0].mxu0
        %2208 = vdwg.mxu0
        %v2209 = vadd.f32 %v2115, %v2179
        %v2210 = vadd.f32 %v2116, %v2182
        %v2211 = vadd.f32 %v2117, %v2187
        %v2212 = vadd.f32 %v2118, %v2190
        %v2213 = vadd.f32 %v2119, %v2195
        %v2214 = vadd.f32 %v2120, %v2198
        %v2215 = vadd.f32 %v2121, %v2203
        %v2216 = vadd.f32 %v2122, %v2206
        %s2217 = scalar_lea.vmem [#allocation7], 16
        %v2218 = vld [vmem:[%s2217] sm:$0xf]
        %v2219 = vunpack.c.l.b16 %v1812
        %v2220 = vpack.c.b16 %v1849, %v1848
        %v2221 = vpack.c.b16 %v1851, %v1850
        %v2222 = vpack.c.b16 %v1853, %v1852
        %v2223 = vpack.c.b16 %v2219, %v1854
        %v2225 = vsel %vm1462, %v2220, 0
        %v2228 = vsel %vm1462, %v2221, 0
        %v2231 = vsel %vm1462, %v2222, 0
        %v2234 = vsel %vm1462, %v2223, 0
        %v2237 = vsel %vm1871, %v2218, 0
        %2239 = vmatprep.subr.bf16.mxu0 0
        %2240 = vmatpush1.bf16.msra.mxu0 %v2237
        %2241 = vmatprep.subr.bf16.mxu0 0
        %2242 = vmatpush1.bf16.msra.mxu0 0
        %2243 = vmatprep.subr.bf16.mxu0 0
        %2244 = vmatpush1.bf16.msra.mxu0 0
        %2245 = vmatprep.subr.bf16.mxu0 0
        %2246 = vmatpush1.bf16.msra.mxu0 0
        %2247 = vmatprep.subr.bf16.mxu0 0
        %2248 = vmatpush1.bf16.msra.mxu0 0
        %2249 = vmatprep.subr.bf16.mxu0 0
        %2250 = vmatpush1.bf16.msra.mxu0 0
        %2251 = vmatprep.subr.bf16.mxu0 0
        %2252 = vmatpush1.bf16.msra.mxu0 0
        %2253 = vmatprep.subr.bf16.mxu0 0
        %2254 = vmatpush1.bf16.msra.mxu0 0
        %2255 = vmatprep.subr.bf16.mxu0 0
        %2256 = vmatpush1.bf16.msra.mxu0 0
        %2257 = vmatprep.subr.bf16.mxu0 0
        %2258 = vmatpush1.bf16.msra.mxu0 0
        %2259 = vmatprep.subr.bf16.mxu0 0
        %2260 = vmatpush1.bf16.msra.mxu0 0
        %2261 = vmatprep.subr.bf16.mxu0 0
        %2262 = vmatpush1.bf16.msra.mxu0 0
        %2263 = vmatprep.subr.bf16.mxu0 0
        %2264 = vmatpush1.bf16.msra.mxu0 0
        %2265 = vmatprep.subr.bf16.mxu0 0
        %2266 = vmatpush1.bf16.msra.mxu0 0
        %2267 = vmatprep.subr.bf16.mxu0 0
        %2268 = vmatpush1.bf16.msra.mxu0 0
        %2269 = vmatprep.subr.bf16.mxu0 0
        %2270 = vmatpush1.bf16.msra.mxu0 0
        %2271 = vmatprep.mubr.bf16.mxu0 0
        %2272 = vmatmul.mubr.bf16.gmra.mrb[0].mxu0 %v2225
        %v2273 = vpop.f32.mrb[0].mxu0
        %v2274 = vadd.f32 0.0, %v2273
        %v2275 = vpop.f32.mrb[0].mxu0
        %v2276 = vpop.f32.mrb[0].mxu0
        %v2277 = vadd.f32 0.0, %v2276
        %v2278 = vpop.f32.mrb[0].mxu0
        %2279 = vmatprep.mubr.bf16.mxu0 0
        %2280 = vmatmul.mubr.bf16.gmra.mrb[0].mxu0 %v2228
        %v2281 = vpop.f32.mrb[0].mxu0
        %v2282 = vadd.f32 0.0, %v2281
        %v2283 = vpop.f32.mrb[0].mxu0
        %v2284 = vpop.f32.mrb[0].mxu0
        %v2285 = vadd.f32 0.0, %v2284
        %v2286 = vpop.f32.mrb[0].mxu0
        %2287 = vmatprep.mubr.bf16.mxu0 0
        %2288 = vmatmul.mubr.bf16.gmra.mrb[0].mxu0 %v2231
        %v2289 = vpop.f32.mrb[0].mxu0
        %v2290 = vadd.f32 0.0, %v2289
        %v2291 = vpop.f32.mrb[0].mxu0
        %v2292 = vpop.f32.mrb[0].mxu0
        %v2293 = vadd.f32 0.0, %v2292
        %v2294 = vpop.f32.mrb[0].mxu0
        %2295 = vmatprep.mubr.bf16.mxu0 0
        %2296 = vmatmul.mubr.bf16.gmra.mrb[0].mxu0 %v2234
        %v2297 = vpop.f32.mrb[0].mxu0
        %v2298 = vadd.f32 0.0, %v2297
        %v2299 = vpop.f32.mrb[0].mxu0
        %v2300 = vpop.f32.mrb[0].mxu0
        %v2301 = vadd.f32 0.0, %v2300
        %v2302 = vpop.f32.mrb[0].mxu0
        %2303 = vdwg.mxu0
        %v2304 = vadd.f32 %v2209, %v2274
        %v2305 = vadd.f32 %v2210, %v2277
        %v2306 = vadd.f32 %v2211, %v2282
        %v2307 = vadd.f32 %v2212, %v2285
        %v2308 = vadd.f32 %v2213, %v2290
        %v2309 = vadd.f32 %v2214, %v2293
        %v2310 = vadd.f32 %v2215, %v2298
        %v2311 = vadd.f32 %v2216, %v2301
        %s2312 = scalar_lea.vmem [#allocation7], 20
        %v2313 = vld [vmem:[%s2312] sm:$0xf]
        %v2314 = vunpack.c.l.b16 %v1844
        %v2315 = vpack.c.b16 %v2025, %v2024
        %v2316 = vpack.c.b16 %v2027, %v2026
        %v2317 = vpack.c.b16 %v2029, %v2028
        %v2318 = vpack.c.b16 %v2314, %v2030
        %v2320 = vsel %vm1462, %v2315, 0
        %v2323 = vsel %vm1462, %v2316, 0
        %v2326 = vsel %vm1462, %v2317, 0
        %v2329 = vsel %vm1462, %v2318, 0
        %v2332 = vsel %vm1871, %v2313, 0
        %2334 = vmatprep.subr.bf16.mxu0 0
        %2335 = vmatpush1.bf16.msra.mxu0 %v2332
        %2336 = vmatprep.subr.bf16.mxu0 0
        %2337 = vmatpush1.bf16.msra.mxu0 0
        %2338 = vmatprep.subr.bf16.mxu0 0
        %2339 = vmatpush1.bf16.msra.mxu0 0
        %2340 = vmatprep.subr.bf16.mxu0 0
        %2341 = vmatpush1.bf16.msra.mxu0 0
        %2342 = vmatprep.subr.bf16.mxu0 0
        %2343 = vmatpush1.bf16.msra.mxu0 0
        %2344 = vmatprep.subr.bf16.mxu0 0
        %2345 = vmatpush1.bf16.msra.mxu0 0
        %2346 = vmatprep.subr.bf16.mxu0 0
        %2347 = vmatpush1.bf16.msra.mxu0 0
        %2348 = vmatprep.subr.bf16.mxu0 0
        %2349 = vmatpush1.bf16.msra.mxu0 0
        %2350 = vmatprep.subr.bf16.mxu0 0
        %2351 = vmatpush1.bf16.msra.mxu0 0
        %2352 = vmatprep.subr.bf16.mxu0 0
        %2353 = vmatpush1.bf16.msra.mxu0 0
        %2354 = vmatprep.subr.bf16.mxu0 0
        %2355 = vmatpush1.bf16.msra.mxu0 0
        %2356 = vmatprep.subr.bf16.mxu0 0
        %2357 = vmatpush1.bf16.msra.mxu0 0
        %2358 = vmatprep.subr.bf16.mxu0 0
        %2359 = vmatpush1.bf16.msra.mxu0 0
        %2360 = vmatprep.subr.bf16.mxu0 0
        %2361 = vmatpush1.bf16.msra.mxu0 0
        %2362 = vmatprep.subr.bf16.mxu0 0
        %2363 = vmatpush1.bf16.msra.mxu0 0
        %2364 = vmatprep.subr.bf16.mxu0 0
        %2365 = vmatpush1.bf16.msra.mxu0 0
        %2366 = vmatprep.mubr.bf16.mxu0 0
        %2367 = vmatmul.mubr.bf16.gmra.mrb[0].mxu0 %v2320
        %v2368 = vpop.f32.mrb[0].mxu0
        %v2369 = vadd.f32 0.0, %v2368
        %v2370 = vpop.f32.mrb[0].mxu0
        %v2371 = vpop.f32.mrb[0].mxu0
        %v2372 = vadd.f32 0.0, %v2371
        %v2373 = vpop.f32.mrb[0].mxu0
        %2374 = vmatprep.mubr.bf16.mxu0 0
        %2375 = vmatmul.mubr.bf16.gmra.mrb[0].mxu0 %v2323
        %v2376 = vpop.f32.mrb[0].mxu0
        %v2377 = vadd.f32 0.0, %v2376
        %v2378 = vpop.f32.mrb[0].mxu0
        %v2379 = vpop.f32.mrb[0].mxu0
        %v2380 = vadd.f32 0.0, %v2379
        %v2381 = vpop.f32.mrb[0].mxu0
        %2382 = vmatprep.mubr.bf16.mxu0 0
        %2383 = vmatmul.mubr.bf16.gmra.mrb[0].mxu0 %v2326
        %v2384 = vpop.f32.mrb[0].mxu0
        %v2385 = vadd.f32 0.0, %v2384
        %v2386 = vpop.f32.mrb[0].mxu0
        %v2387 = vpop.f32.mrb[0].mxu0
        %v2388 = vadd.f32 0.0, %v2387
        %v2389 = vpop.f32.mrb[0].mxu0
        %2390 = vmatprep.mubr.bf16.mxu0 0
        %2391 = vmatmul.mubr.bf16.gmra.mrb[0].mxu0 %v2329
        %v2392 = vpop.f32.mrb[0].mxu0
        %v2393 = vadd.f32 0.0, %v2392
        %v2394 = vpop.f32.mrb[0].mxu0
        %v2395 = vpop.f32.mrb[0].mxu0
        %v2396 = vadd.f32 0.0, %v2395
        %v2397 = vpop.f32.mrb[0].mxu0
        %2398 = vdwg.mxu0
        %v2399 = vadd.f32 %v2304, %v2369
        %v2400 = vadd.f32 %v2305, %v2372
        %v2401 = vadd.f32 %v2306, %v2377
        %v2402 = vadd.f32 %v2307, %v2380
        %v2403 = vadd.f32 %v2308, %v2385
        %v2404 = vadd.f32 %v2309, %v2388
        %v2405 = vadd.f32 %v2310, %v2393
        %v2406 = vadd.f32 %v2311, %v2396
        %s2407 = scalar_lea.vmem [#allocation7], 24
        %v2408 = vld [vmem:[%s2407] sm:$0xf]
        %v2409 = vsel %vm1462, %v1699, 0
        %v2412 = vsel %vm1871, %v2408, 0
        %2414 = vmatprep.subr.bf16.mxu0 0
        %2415 = vmatpush1.bf16.msra.mxu0 %v2412
        %2416 = vmatprep.subr.bf16.mxu0 0
        %2417 = vmatpush1.bf16.msra.mxu0 0
        %2418 = vmatprep.subr.bf16.mxu0 0
        %2419 = vmatpush1.bf16.msra.mxu0 0
        %2420 = vmatprep.subr.bf16.mxu0 0
        %2421 = vmatpush1.bf16.msra.mxu0 0
        %2422 = vmatprep.subr.bf16.mxu0 0
        %2423 = vmatpush1.bf16.msra.mxu0 0
        %2424 = vmatprep.subr.bf16.mxu0 0
        %2425 = vmatpush1.bf16.msra.mxu0 0
        %2426 = vmatprep.subr.bf16.mxu0 0
        %2427 = vmatpush1.bf16.msra.mxu0 0
        %2428 = vmatprep.subr.bf16.mxu0 0
        %2429 = vmatpush1.bf16.msra.mxu0 0
        %2430 = vmatprep.subr.bf16.mxu0 0
        %2431 = vmatpush1.bf16.msra.mxu0 0
        %2432 = vmatprep.subr.bf16.mxu0 0
        %2433 = vmatpush1.bf16.msra.mxu0 0
        %2434 = vmatprep.subr.bf16.mxu0 0
        %2435 = vmatpush1.bf16.msra.mxu0 0
        %2436 = vmatprep.subr.bf16.mxu0 0
        %2437 = vmatpush1.bf16.msra.mxu0 0
        %2438 = vmatprep.subr.bf16.mxu0 0
        %2439 = vmatpush1.bf16.msra.mxu0 0
        %2440 = vmatprep.subr.bf16.mxu0 0
        %2441 = vmatpush1.bf16.msra.mxu0 0
        %2442 = vmatprep.subr.bf16.mxu0 0
        %2443 = vmatpush1.bf16.msra.mxu0 0
        %2444 = vmatprep.subr.bf16.mxu0 0
        %2445 = vmatpush1.bf16.msra.mxu0 0
        %2446 = vmatprep.mubr.bf16.mxu0 0
        %2447 = vmatmul.mubr.bf16.gmra.mrb[0].mxu0 %v1946
        %v2448 = vpop.f32.mrb[0].mxu0
        %v2449 = vadd.f32 0.0, %v2448
        %v2450 = vpop.f32.mrb[0].mxu0
        %v2451 = vpop.f32.mrb[0].mxu0
        %v2452 = vadd.f32 0.0, %v2451
        %v2453 = vpop.f32.mrb[0].mxu0
        %2454 = vmatprep.mubr.bf16.mxu0 0
        %2455 = vmatmul.mubr.bf16.gmra.mrb[0].mxu0 %v1949
        %v2456 = vpop.f32.mrb[0].mxu0
        %v2457 = vadd.f32 0.0, %v2456
        %v2458 = vpop.f32.mrb[0].mxu0
        %v2459 = vpop.f32.mrb[0].mxu0
        %v2460 = vadd.f32 0.0, %v2459
        %v2461 = vpop.f32.mrb[0].mxu0
        %2462 = vmatprep.mubr.bf16.mxu0 0
        %2463 = vmatmul.mubr.bf16.gmra.mrb[0].mxu0 %v1952
        %v2464 = vpop.f32.mrb[0].mxu0
        %v2465 = vadd.f32 0.0, %v2464
        %v2466 = vpop.f32.mrb[0].mxu0
        %v2467 = vpop.f32.mrb[0].mxu0
        %v2468 = vadd.f32 0.0, %v2467
        %v2469 = vpop.f32.mrb[0].mxu0
        %2470 = vmatprep.mubr.bf16.mxu0 0
        %2471 = vmatmul.mubr.bf16.gmra.mrb[0].mxu0 %v2409
        %v2472 = vpop.f32.mrb[0].mxu0
        %v2473 = vadd.f32 0.0, %v2472
        %v2474 = vpop.f32.mrb[0].mxu0
        %v2475 = vpop.f32.mrb[0].mxu0
        %v2476 = vadd.f32 0.0, %v2475
        %v2477 = vpop.f32.mrb[0].mxu0
        %2478 = vdwg.mxu0
        %v2479 = vadd.f32 %v2399, %v2449
        %v2480 = vadd.f32 %v2400, %v2452
        %v2481 = vadd.f32 %v2401, %v2457
        %v2482 = vadd.f32 %v2402, %v2460
        %v2483 = vadd.f32 %v2403, %v2465
        %v2484 = vadd.f32 %v2404, %v2468
        %v2485 = vadd.f32 %v2405, %v2473
        %v2486 = vadd.f32 %v2406, %v2476
        %s2487 = scalar_lea.vmem [#allocation7], 28
        %v2488 = vld [vmem:[%s2487] sm:$0xf]
        %v2489 = vpack.c.b16 %v2219, %v2219
        %v2491 = vsel %vm1462, %v2489, 0
        %v2494 = vsel %vm1871, %v2488, 0
        %2496 = vmatprep.subr.bf16.mxu0 0
        %2497 = vmatpush1.bf16.msra.mxu0 %v2494
        %2498 = vmatprep.subr.bf16.mxu0 0
        %2499 = vmatpush1.bf16.msra.mxu0 0
        %2500 = vmatprep.subr.bf16.mxu0 0
        %2501 = vmatpush1.bf16.msra.mxu0 0
        %2502 = vmatprep.subr.bf16.mxu0 0
        %2503 = vmatpush1.bf16.msra.mxu0 0
        %2504 = vmatprep.subr.bf16.mxu0 0
        %2505 = vmatpush1.bf16.msra.mxu0 0
        %2506 = vmatprep.subr.bf16.mxu0 0
        %2507 = vmatpush1.bf16.msra.mxu0 0
        %2508 = vmatprep.subr.bf16.mxu0 0
        %2509 = vmatpush1.bf16.msra.mxu0 0
        %2510 = vmatprep.subr.bf16.mxu0 0
        %2511 = vmatpush1.bf16.msra.mxu0 0
        %2512 = vmatprep.subr.bf16.mxu0 0
        %2513 = vmatpush1.bf16.msra.mxu0 0
        %2514 = vmatprep.subr.bf16.mxu0 0
        %2515 = vmatpush1.bf16.msra.mxu0 0
        %2516 = vmatprep.subr.bf16.mxu0 0
        %2517 = vmatpush1.bf16.msra.mxu0 0
        %2518 = vmatprep.subr.bf16.mxu0 0
        %2519 = vmatpush1.bf16.msra.mxu0 0
        %2520 = vmatprep.subr.bf16.mxu0 0
        %2521 = vmatpush1.bf16.msra.mxu0 0
        %2522 = vmatprep.subr.bf16.mxu0 0
        %2523 = vmatpush1.bf16.msra.mxu0 0
        %2524 = vmatprep.subr.bf16.mxu0 0
        %2525 = vmatpush1.bf16.msra.mxu0 0
        %2526 = vmatprep.subr.bf16.mxu0 0
        %2527 = vmatpush1.bf16.msra.mxu0 0
        %2528 = vmatprep.mubr.bf16.mxu0 0
        %2529 = vmatmul.mubr.bf16.gmra.mrb[0].mxu0 %v1863
        %v2530 = vpop.f32.mrb[0].mxu0
        %v2531 = vadd.f32 0.0, %v2530
        %v2532 = vpop.f32.mrb[0].mxu0
        %v2533 = vpop.f32.mrb[0].mxu0
        %v2534 = vadd.f32 0.0, %v2533
        %v2535 = vpop.f32.mrb[0].mxu0
        %2536 = vmatprep.mubr.bf16.mxu0 0
        %2537 = vmatmul.mubr.bf16.gmra.mrb[0].mxu0 %v1866
        %v2538 = vpop.f32.mrb[0].mxu0
        %v2539 = vadd.f32 0.0, %v2538
        %v2540 = vpop.f32.mrb[0].mxu0
        %v2541 = vpop.f32.mrb[0].mxu0
        %v2542 = vadd.f32 0.0, %v2541
        %v2543 = vpop.f32.mrb[0].mxu0
        %2544 = vmatprep.mubr.bf16.mxu0 0
        %2545 = vmatmul.mubr.bf16.gmra.mrb[0].mxu0 %v1869
        %v2546 = vpop.f32.mrb[0].mxu0
        %v2547 = vadd.f32 0.0, %v2546
        %v2548 = vpop.f32.mrb[0].mxu0
        %v2549 = vpop.f32.mrb[0].mxu0
        %v2550 = vadd.f32 0.0, %v2549
        %v2551 = vpop.f32.mrb[0].mxu0
        %2552 = vmatprep.mubr.bf16.mxu0 0
        %2553 = vmatmul.mubr.bf16.gmra.mrb[0].mxu0 %v2491
        %v2554 = vpop.f32.mrb[0].mxu0
        %v2555 = vadd.f32 0.0, %v2554
        %v2556 = vpop.f32.mrb[0].mxu0
        %v2557 = vpop.f32.mrb[0].mxu0
        %v2558 = vadd.f32 0.0, %v2557
        %v2559 = vpop.f32.mrb[0].mxu0
        %2560 = vdwg.mxu0
        %v2561 = vadd.f32 %v2479, %v2531
        %v2562 = vadd.f32 %v2480, %v2534
        %v2563 = vadd.f32 %v2481, %v2539
        %v2564 = vadd.f32 %v2482, %v2542
        %v2565 = vadd.f32 %v2483, %v2547
        %v2566 = vadd.f32 %v2484, %v2550
        %v2567 = vadd.f32 %v2485, %v2555
        %v2568 = vadd.f32 %v2486, %v2558
        %s2569 = scalar_lea.vmem [#allocation7], 32
        %v2570 = vld [vmem:[%s2569] sm:$0xf]
        %v2571 = vpack.c.b16 %v2314, %v2314
        %v2573 = vsel %vm1462, %v2571, 0
        %v2576 = vsel %vm1871, %v2570, 0
        %2578 = vmatprep.subr.bf16.mxu0 0
        %2579 = vmatpush1.bf16.msra.mxu0 %v2576
        %2580 = vmatprep.subr.bf16.mxu0 0
        %2581 = vmatpush1.bf16.msra.mxu0 0
        %2582 = vmatprep.subr.bf16.mxu0 0
        %2583 = vmatpush1.bf16.msra.mxu0 0
        %2584 = vmatprep.subr.bf16.mxu0 0
        %2585 = vmatpush1.bf16.msra.mxu0 0
        %2586 = vmatprep.subr.bf16.mxu0 0
        %2587 = vmatpush1.bf16.msra.mxu0 0
        %2588 = vmatprep.subr.bf16.mxu0 0
        %2589 = vmatpush1.bf16.msra.mxu0 0
        %2590 = vmatprep.subr.bf16.mxu0 0
        %2591 = vmatpush1.bf16.msra.mxu0 0
        %2592 = vmatprep.subr.bf16.mxu0 0
        %2593 = vmatpush1.bf16.msra.mxu0 0
        %2594 = vmatprep.subr.bf16.mxu0 0
        %2595 = vmatpush1.bf16.msra.mxu0 0
        %2596 = vmatprep.subr.bf16.mxu0 0
        %2597 = vmatpush1.bf16.msra.mxu0 0
        %2598 = vmatprep.subr.bf16.mxu0 0
        %2599 = vmatpush1.bf16.msra.mxu0 0
        %2600 = vmatprep.subr.bf16.mxu0 0
        %2601 = vmatpush1.bf16.msra.mxu0 0
        %2602 = vmatprep.subr.bf16.mxu0 0
        %2603 = vmatpush1.bf16.msra.mxu0 0
        %2604 = vmatprep.subr.bf16.mxu0 0
        %2605 = vmatpush1.bf16.msra.mxu0 0
        %2606 = vmatprep.subr.bf16.mxu0 0
        %2607 = vmatpush1.bf16.msra.mxu0 0
        %2608 = vmatprep.subr.bf16.mxu0 0
        %2609 = vmatpush1.bf16.msra.mxu0 0
        %2610 = vmatprep.mubr.bf16.mxu0 0
        %2611 = vmatmul.mubr.bf16.gmra.mrb[0].mxu0 %v2039
        %v2612 = vpop.f32.mrb[0].mxu0
        %v2613 = vadd.f32 0.0, %v2612
        %v2614 = vpop.f32.mrb[0].mxu0
        %v2615 = vpop.f32.mrb[0].mxu0
        %v2616 = vadd.f32 0.0, %v2615
        %v2617 = vpop.f32.mrb[0].mxu0
        %2618 = vmatprep.mubr.bf16.mxu0 0
        %2619 = vmatmul.mubr.bf16.gmra.mrb[0].mxu0 %v2042
        %v2620 = vpop.f32.mrb[0].mxu0
        %v2621 = vadd.f32 0.0, %v2620
        %v2622 = vpop.f32.mrb[0].mxu0
        %v2623 = vpop.f32.mrb[0].mxu0
        %v2624 = vadd.f32 0.0, %v2623
        %v2625 = vpop.f32.mrb[0].mxu0
        %2626 = vmatprep.mubr.bf16.mxu0 0
        %2627 = vmatmul.mubr.bf16.gmra.mrb[0].mxu0 %v2045
        %v2628 = vpop.f32.mrb[0].mxu0
        %v2629 = vadd.f32 0.0, %v2628
        %v2630 = vpop.f32.mrb[0].mxu0
        %v2631 = vpop.f32.mrb[0].mxu0
        %v2632 = vadd.f32 0.0, %v2631
        %v2633 = vpop.f32.mrb[0].mxu0
        %2634 = vmatprep.mubr.bf16.mxu0 0
        %2635 = vmatmul.mubr.bf16.gmra.mrb[0].mxu0 %v2573
        %v2636 = vpop.f32.mrb[0].mxu0
        %v2637 = vadd.f32 0.0, %v2636
        %v2638 = vpop.f32.mrb[0].mxu0
        %v2639 = vpop.f32.mrb[0].mxu0
        %v2640 = vadd.f32 0.0, %v2639
        %v2641 = vpop.f32.mrb[0].mxu0
        %2642 = vdwg.mxu0
        %v2643 = vadd.f32 %v2561, %v2613
        %v2644 = vadd.f32 %v2562, %v2616
        %v2645 = vadd.f32 %v2563, %v2621
        %v2646 = vadd.f32 %v2564, %v2624
        %v2647 = vadd.f32 %v2565, %v2629
        %v2648 = vadd.f32 %v2566, %v2632
        %v2649 = vadd.f32 %v2567, %v2637
        %v2650 = vadd.f32 %v2568, %v2640
        %v2651 = vsel %vm1462, %v2643, 0.0
        %v2652 = vsel %vm1462, %v2644, 0.0
        %v2653 = vadd.f32 %v2651, %v2652
        %v2654 = vsel %vm1462, %v2645, 0.0
        %v2655 = vadd.f32 %v2653, %v2654
        %v2656 = vsel %vm1462, %v2646, 0.0
        %v2657 = vadd.f32 %v2655, %v2656
        %v2658 = vsel %vm1462, %v2647, 0.0
        %v2659 = vadd.f32 %v2657, %v2658
        %v2660 = vsel %vm1462, %v2648, 0.0
        %v2661 = vadd.f32 %v2659, %v2660
        %v2662 = vsel %vm1462, %v2649, 0.0
        %v2663 = vadd.f32 %v2661, %v2662
        %v2664 = vsel %vm1462, %v2650, 0.0
        %v2665 = vadd.f32 %v2663, %v2664
        %v2666 = vrot.slane %v2665, 4
        %v2667 = vadd.f32 %v2665, %v2666
        %v2668 = vrot.slane %v2667, 2
        %v2669 = vadd.f32 %v2667, %v2668
        %v2670 = vrot.slane %v2669, 1
        %v2671 = vadd.f32 %v2669, %v2670
        %v2672 = vmul.f32 %v2671, 0.015625
        %v2673 = vsub.f32 %v2643, %v2672
        %v2674 = vsub.f32 %v2644, %v2672
        %v2675 = vsub.f32 %v2645, %v2672
        %v2676 = vsub.f32 %v2646, %v2672
        %v2677 = vsub.f32 %v2647, %v2672
        %v2678 = vsub.f32 %v2648, %v2672
        %v2679 = vsub.f32 %v2649, %v2672
        %v2680 = vsub.f32 %v2650, %v2672
        %v2681 = vmul.f32 %v2673, %v2673
        %v2682 = vmul.f32 %v2674, %v2674
        %v2683 = vmul.f32 %v2675, %v2675
        %v2684 = vmul.f32 %v2676, %v2676
        %v2685 = vmul.f32 %v2677, %v2677
        %v2686 = vmul.f32 %v2678, %v2678
        %v2687 = vmul.f32 %v2679, %v2679
        %v2688 = vmul.f32 %v2680, %v2680
        %v2689 = vsel %vm1462, %v2681, 0.0
        %v2690 = vsel %vm1462, %v2682, 0.0
        %v2691 = vadd.f32 %v2689, %v2690
        %v2692 = vsel %vm1462, %v2683, 0.0
        %v2693 = vadd.f32 %v2691, %v2692
        %v2694 = vsel %vm1462, %v2684, 0.0
        %v2695 = vadd.f32 %v2693, %v2694
        %v2696 = vsel %vm1462, %v2685, 0.0
        %v2697 = vadd.f32 %v2695, %v2696
        %v2698 = vsel %vm1462, %v2686, 0.0
        %v2699 = vadd.f32 %v2697, %v2698
        %v2700 = vsel %vm1462, %v2687, 0.0
        %v2701 = vadd.f32 %v2699, %v2700
        %v2702 = vsel %vm1462, %v2688, 0.0
        %v2703 = vadd.f32 %v2701, %v2702
        %v2704 = vrot.slane %v2703, 4
        %v2705 = vadd.f32 %v2703, %v2704
        %v2706 = vrot.slane %v2705, 2
        %v2707 = vadd.f32 %v2705, %v2706
        %v2708 = vrot.slane %v2707, 1
        %v2709 = vadd.f32 %v2707, %v2708
        %v2710 = vmul.f32 %v2709, 0.015625
        %v2711 = vadd.f32 %v2710, 1e-05
        %v2712 = vrsqrt.pop %v2711
        %v2713 = vmul.f32 %v2673, %v2712
        %v2714 = vmul.f32 %v2674, %v2712
        %v2715 = vmul.f32 %v2675, %v2712
        %v2716 = vmul.f32 %v2676, %v2712
        %v2717 = vmul.f32 %v2677, %v2712
        %v2718 = vmul.f32 %v2678, %v2712
        %v2719 = vmul.f32 %v2679, %v2712
        %v2720 = vmul.f32 %v2680, %v2712
        %v2721 = vmax.f32 %v2713, 0.0
        %v2722 = vmax.f32 %v2714, 0.0
        %v2723 = vmax.f32 %v2715, 0.0
        %v2724 = vmax.f32 %v2716, 0.0
        %v2725 = vmax.f32 %v2717, 0.0
        %v2726 = vmax.f32 %v2718, 0.0
        %v2727 = vmax.f32 %v2719, 0.0
        %v2728 = vmax.f32 %v2720, 0.0
        %v2729 = vpack.c.bf16 %v2722, %v2721
        %v2730 = vpack.c.bf16 %v2724, %v2723
        %v2731 = vpack.c.bf16 %v2726, %v2725
        %v2732 = vpack.c.bf16 %v2728, %v2727
        %v2737 = vunpack.c.l.b16 %v2729
        %v2738 = vunpack.c.h.b16 %v2729
        %v2739 = vunpack.c.l.b16 %v2730
        %v2740 = vunpack.c.h.b16 %v2730
        %v2741 = vunpack.c.l.b16 %v2731
        %v2742 = vunpack.c.h.b16 %v2731
        %v2743 = vunpack.c.l.b16 %v2732
        %v2744 = vunpack.c.h.b16 %v2732
        %v2745 = vpack.c.b16 %v2737, %v2737
        %v2746 = vpack.c.b16 %v2738, %v2738
        %v2747 = vpack.c.b16 %v2739, %v2739
        %v2748 = vpack.c.b16 %v2740, %v2740
        %v2749 = vpack.c.b16 %v2741, %v2741
        %v2750 = vpack.c.b16 %v2742, %v2742
        %v2751 = vpack.c.b16 %v2743, %v2743
        %v2752 = vpack.c.b16 %v2744, %v2744
        %vm2761 = vcmask 60416
        %2762 = vst.msk [vmem:[%s217] sm:$0xf] %vm2761, %v2745
        %2763 = vst.msk [vmem:[%s217 + $0x4] sm:$0xf] %vm2761, %v2746
        %2764 = vst.msk [vmem:[%s217 + $0x8] sm:$0xf] %vm2761, %v2747
        %2765 = vst.msk [vmem:[%s217 + $0xc] sm:$0xf] %vm2761, %v2748
        %2766 = vst.msk [vmem:[%s217 + $0x10] sm:$0xf] %vm2761, %v2749
        %2767 = vst.msk [vmem:[%s217 + $0x14] sm:$0xf] %vm2761, %v2750
        %2768 = vst.msk [vmem:[%s217 + $0x18] sm:$0xf] %vm2761, %v2751
        %2769 = vst.msk [vmem:[%s217 + $0x1c] sm:$0xf] %vm2761, %v2752
        %s2770 = sand.u32 %s97, 1
        %s2771 = scalar_lea.sflag [#allocation4], %s2770
        %s2772 = sand.u32 %s97, 1
        %s2773 = smul.addr %s2772, 32
        %s2774 = scalar_lea.vmem [#allocation8], %s2773
        // Predicated region
        $region45: #{down_forward.1} parent=31 // pred_check
          %p2775 = pneg %p107
        $region46: #{down_forward.1} parent=31 // pred_check_branch
          %2777 = sbr.rel (%p2775) target = $region48
        $region47: #{down_forward.1} parent=31 // pred_region
          %s2779 = ssub.s32 512, 512
          %2780 = vsyncadd %s2771, %s2779
          %s2781 = smul.addr %s21, 8
          %s2782 = smul.addr %s2781, 64
          %s2783 = scalar_lea.hbm %s3, %s2782
          %s2784 = sshll.u32 %s2774, 4
          %s2785 = int_to_ptr.vmem [resolvable:$true] %s2784
          %2790 = dma.vmem_to_hbm [thread:$0]  %s2785, 512, %s2783, %s2771, 64, 64, 4
        $region48: #{down_forward.1} parent=31 // pred_fallthru
          _
      $region32: #{down_forward.1} parent=5 // pred_fallthru
        _
      %p2791 = scmp.le.s32.totalorder 2, %s16
      // Predicated region
      $region49: #{down_forward.1} parent=5 // pred_check
        %p2792 = pneg %p2791
      $region50: #{down_forward.1} parent=5 // pred_check_branch
        %2794 = sbr.rel (%p2792) target = $region52
      $region51: #{down_forward.1} parent=5 // pred_region
        %s2795 = ssub.s32 %s16, 2
        // Predicated region
        $region53: #{down_forward.1} parent=51 // pred_check
          %p2796 = pneg %p113
        $region54: #{down_forward.1} parent=51 // pred_check_branch
          %2798 = sbr.rel (%p2796) target = $region56
        $region55: #{down_forward.1} parent=51 // pred_region
          %s2799 = sand.u32 %s98, 1
          %s2800 = scalar_lea.sflag [#allocation4], %s2799
          %s2801 = sand.u32 %s98, 1
          %s2802 = smul.addr %s2801, 32
          %s2803 = scalar_lea.vmem [#allocation8], %s2802
          %2804 = dma.done %s2800, 512
        $region56: #{down_forward.1} parent=51 // pred_fallthru
          _
      $region52: #{down_forward.1} parent=5 // pred_fallthru
        _
    $region6: #{down_forward.1} parent=1 // loop_footer
      %s20 = sadd.s32 1, %s16
    $region7: #{down_forward.1} parent=1 // loop_footer_branch
      %15 = sbr.rel target = $region3
    $region8: #{down_forward.1} parent=1 // loop_exit
      _
    %2805 = vsyncpa [#allocation3], 1
    %s2806 = scalar_lea.sflag [#allocation3], 1
    %2807 = vsyncpa %s2806, 1
    %2808 = vsyncpa [#allocation6], 1
    %2809 = vsyncpa [#allocation4], 1
    %s2810 = scalar_lea.sflag [#allocation4], 1
    %2811 = vsyncpa %s2810, 1

</llo_original>
